<compile_context>
chip_gen: v7x
topology: tpu7x:2x2x1
jax: 0.10.0
libtpu: 0.0.40
codegen_flags: <defaults>
</compile_context>

<pallas_src>
import jax
import jax.numpy as jnp
from jax import lax
from jax.experimental import pallas as pl
from jax.experimental.pallas import tpu as pltpu

# ---------------------------- sizes (small, synthetic) ----------------------------
V   = 32            # output_dim (vocab)
E   = 16            # emb_dim
ENC = 32            # enc_hid_dim
H   = 32            # dec_hid_dim
L   = 4             # LSTM layers (fixed by the module)
B   = 8             # batch
IN0 = E + ENC       # 48, LSTM layer-0 input width
G   = 4 * H         # 128, gate width == one full lane group


# ---------------------------------- Pallas kernel ----------------------------------
def decoder_kernel(ids_ref, emb_ref, ctx_ref, h0_ref, c0_ref,
                   wih0_ref, wih_ref, whh_ref, b_ref,
                   wfct_ref, wfcb_ref, bfc_ref,
                   pred_ref, hN_ref, cN_ref):
    """Single-step 4-layer LSTM + output linear, fully VMEM-resident.

    ids_ref   (B, 1)  int32     token ids
    emb_ref   (V, E)            embedding table
    ctx_ref   (B, ENC)          encoder context
    h0_ref    (L, B, H)         initial hidden states (torch layout)
    c0_ref    (L, B, H)         initial cell states
    wih0_ref  (IN0, G)          layer-0 W_ih^T, i/f/o columns pre-scaled by 0.5
    wih_ref   (L-1, H, G)       layers 1..3 W_ih^T, pre-scaled
    whh_ref   (L, H, G)         W_hh^T per layer, pre-scaled
    b_ref     (L, G)            b_ih + b_hh per layer, i/f/o lanes pre-scaled
    wfct_ref  (IN0, V)          fc weight rows for [embedded | context]
    wfcb_ref  (H, V)            fc weight rows for h[-1]
    bfc_ref   (1, V)            fc bias
    pred_ref  (B, V)            prediction
    hN_ref    (L, B, H)         new hidden states (torch layout)
    cN_ref    (L, B, H)         new cell states
    """
    # In-kernel embedding gather: one-hot(ids) @ table (exact row-select on the MXU).
    onehot = (ids_ref[...] ==
              lax.broadcasted_iota(jnp.int32, (B, V), 1)).astype(jnp.float32)
    emb = jnp.dot(onehot, emb_ref[...], preferred_element_type=jnp.float32)   # (B, E)
    x0 = jnp.concatenate([emb, ctx_ref[...]], axis=1)                         # (B, IN0)

    # Off the critical path: the four hh gate partials are chain-independent and
    # are issued back-to-back so they pipeline in MXU slack while layer 0 starts.
    gates_hh = [
        jnp.dot(h0_ref[l], whh_ref[l], preferred_element_type=jnp.float32)
        + b_ref[l:l + 1, :]
        for l in range(L)
    ]

    # Off the critical path: the input-dependent 60% of the FC hides under the chain.
    pred_part = (jnp.dot(x0, wfct_ref[...], preferred_element_type=jnp.float32)
                 + bfc_ref[...])                                               # (B, V)

    layer_in = x0
    for l in range(L):                                  # static unroll, serial chain
        w_ih = wih0_ref[...] if l == 0 else wih_ref[l - 1]
        gates = (jnp.dot(layer_in, w_ih, preferred_element_type=jnp.float32)
                 + gates_hh[l])                          # (B, G) == one (8,128) vreg

        # Gate scale is folded into the packed weights/bias, so ONE full-vreg tanh
        # covers all four gates: sigmoid(x) = 0.5 + 0.5*tanh(x/2) on i/f/o lanes,
        # plain tanh on g lanes.
        t = jnp.tanh(gates)
        u = 0.5 + 0.5 * t
        i = u[:, 0 * H:1 * H]
        f = u[:, 1 * H:2 * H]
        g = t[:, 2 * H:3 * H]
        o = u[:, 3 * H:4 * H]

        c_new = f * c0_ref[l] + i * g
        h_new = o * jnp.tanh(c_new)
        hN_ref[l] = h_new
        cN_ref[l] = c_new
        layer_in = h_new                                 # feed next layer

    # Epilogue: only the small h[-1] part of the FC remains on the tail.
    pred_ref[...] = pred_part + jnp.dot(layer_in, wfcb_ref[...],
                                        preferred_element_type=jnp.float32)


# ------------------------ one-time parameter packing (hoisted) ------------------------
def pack_params(params):
    """Pre-transpose / pre-stack all weights once, and fold the 0.5 sigmoid-via-tanh
    scale into the i/f/o gate columns & bias lanes: tanh(0.5*(Wx+b)) == tanh((0.5W)x + 0.5b)."""
    lane = jnp.arange(G)
    gscale = jnp.where((lane >= 2 * H) & (lane < 3 * H), 1.0, 0.5).astype(jnp.float32)

    packed = {"embedding": params["embedding"]}
    packed["wih0"] = params["wih"][0].T * gscale[None, :]                      # (IN0, G)
    packed["wih"] = jnp.stack([params["wih"][l].T * gscale[None, :]
                               for l in range(1, L)])                          # (L-1, H, G)
    packed["whh"] = jnp.stack([params["whh"][l].T * gscale[None, :]
                               for l in range(L)])                             # (L, H, G)
    packed["b"] = jnp.stack([(params["bih"][l] + params["bhh"][l]) * gscale
                             for l in range(L)])                               # (L, G)
    packed["wfc_top"] = params["wfc"][:, :IN0].T                               # (IN0, V)
    packed["wfc_bot"] = params["wfc"][:, IN0:].T                               # (H, V)
    packed["bfc"] = params["bfc"][None, :]                                     # (1, V)
    return packed


# ---------------------------------- wrapper (glue) ----------------------------------
@jax.jit
def decoder_forward(packed, input_ids, hidden, cell, context):
    """input_ids (B,) int; hidden/cell (L,B,H); context (B,ENC) -> (pred, (h, c))."""
    ids = input_ids.astype(jnp.int32).reshape(B, 1)       # only remaining glue op
    vmem = pl.BlockSpec(memory_space=pltpu.MemorySpace.VMEM)

    pred, h_new, c_new = pl.pallas_call(
        decoder_kernel,
        out_shape=(
            jax.ShapeDtypeStruct((B, V), jnp.float32),
            jax.ShapeDtypeStruct((L, B, H), jnp.float32),
            jax.ShapeDtypeStruct((L, B, H), jnp.float32),
        ),
        in_specs=[vmem] * 12,
        out_specs=(vmem, vmem, vmem),
    )(ids, packed["embedding"], context, hidden, cell,
      packed["wih0"], packed["wih"], packed["whh"], packed["b"],
      packed["wfc_top"], packed["wfc_bot"], packed["bfc"])

    return pred, (h_new, c_new)


# ---------------------------- pure-JAX reference (for check) ----------------------------
def decoder_reference(params, input_ids, hidden, cell, context):
    embedded = params["embedding"][input_ids]
    x = jnp.concatenate([embedded, context], axis=1)
    hs, cs = [], []
    layer_in = x
    for l in range(L):
        gates = (layer_in @ params["wih"][l].T + hidden[l] @ params["whh"][l].T
                 + params["bih"][l] + params["bhh"][l])
        i = jax.nn.sigmoid(gates[:, 0 * H:1 * H])
        f = jax.nn.sigmoid(gates[:, 1 * H:2 * H])
        g = jnp.tanh(gates[:, 2 * H:3 * H])
        o = jax.nn.sigmoid(gates[:, 3 * H:4 * H])
        c_new = f * cell[l] + i * g
        h_new = o * jnp.tanh(c_new)
        hs.append(h_new)
        cs.append(c_new)
        layer_in = h_new
    h_new = jnp.stack(hs)
    c_new = jnp.stack(cs)
    fc_in = jnp.concatenate([embedded, context, h_new[-1]], axis=1)
    pred = fc_in @ params["wfc"].T + params["bfc"]
    return pred, (h_new, c_new)


# ---------------------------------- parameter init ----------------------------------
def init_params(key):
    keys = jax.random.split(key, 20)
    it = iter(keys)
    nxt = lambda: next(it)
    params = {}
    params["embedding"] = jax.random.normal(nxt(), (V, E), jnp.float32)
    bound = 1.0 / float(H) ** 0.5
    params["wih"], params["whh"], params["bih"], params["bhh"] = [], [], [], []
    for l in range(L):
        in_dim = E + ENC if l == 0 else H
        params["wih"].append(jax.random.uniform(nxt(), (4 * H, in_dim), jnp.float32, -bound, bound))
        params["whh"].append(jax.random.uniform(nxt(), (4 * H, H), jnp.float32, -bound, bound))
        params["bih"].append(jax.random.uniform(nxt(), (4 * H,), jnp.float32, -bound, bound))
        params["bhh"].append(jax.random.uniform(nxt(), (4 * H,), jnp.float32, -bound, bound))
    fc_in = E + ENC + H
    fb = 1.0 / float(fc_in) ** 0.5
    params["wfc"] = jax.random.uniform(nxt(), (V, fc_in), jnp.float32, -fb, fb)
    params["bfc"] = jax.random.uniform(nxt(), (V,), jnp.float32, -fb, fb)
    return params


if __name__ == "__main__":
    root = jax.random.PRNGKey(0)
    k_par, k_in, k_h, k_c, k_ctx = jax.random.split(root, 5)

    params = init_params(k_par)
    packed = pack_params(params)          # hoisted one-time weight packing

    input_ids = jax.random.randint(k_in, (B,), 0, V, dtype=jnp.int32)
    hidden = 0.1 * jax.random.normal(k_h, (L, B, H), jnp.float32)
    cell = 0.1 * jax.random.normal(k_c, (L, B, H), jnp.float32)
    context = jax.random.normal(k_ctx, (B, ENC), jnp.float32)

    pred, (h_new, c_new) = decoder_forward(packed, input_ids, hidden, cell, context)
    jax.block_until_ready((pred, h_new, c_new))

    pred_r, (h_r, c_r) = decoder_reference(params, input_ids, hidden, cell, context)
    assert pred.shape == (B, V) and h_new.shape == (L, B, H) and c_new.shape == (L, B, H)
    assert jnp.allclose(pred, pred_r, atol=1e-4, rtol=1e-4)
    assert jnp.allclose(h_new, h_r, atol=1e-4, rtol=1e-4)
    assert jnp.allclose(c_new, c_r, atol=1e-4, rtol=1e-4)

    print("KERNEL_OK")
</pallas_src>

<mosaic_0001>
module attributes {stable_mosaic.version = 11 : i64} {
  func.func @decoder_kernel(%arg0: memref<8x1xi32, #tpu.memory_space<vmem>>, %arg1: memref<32x16xf32, #tpu.memory_space<vmem>>, %arg2: memref<8x32xf32, #tpu.memory_space<vmem>>, %arg3: memref<4x8x32xf32, #tpu.memory_space<vmem>>, %arg4: memref<4x8x32xf32, #tpu.memory_space<vmem>>, %arg5: memref<48x128xf32, #tpu.memory_space<vmem>>, %arg6: memref<3x32x128xf32, #tpu.memory_space<vmem>>, %arg7: memref<4x32x128xf32, #tpu.memory_space<vmem>>, %arg8: memref<4x128xf32, #tpu.memory_space<vmem>>, %arg9: memref<48x32xf32, #tpu.memory_space<vmem>>, %arg10: memref<32x32xf32, #tpu.memory_space<vmem>>, %arg11: memref<1x32xf32, #tpu.memory_space<vmem>>, %arg12: memref<8x32xf32, #tpu.memory_space<vmem>>, %arg13: memref<4x8x32xf32, #tpu.memory_space<vmem>>, %arg14: memref<4x8x32xf32, #tpu.memory_space<vmem>>) attributes {dimension_semantics = [], scalar_prefetch = 0 : i64, scratch_operands = 0 : i64, tpu.core_type = #tpu.core_type<tc>} {
    %c0 = arith.constant 0 : index
    %c0_0 = arith.constant 0 : index
    %0 = vector.load %arg0[%c0, %c0_0] : memref<8x1xi32, #tpu.memory_space<vmem>>, vector<8x1xi32>
    %1 = tpu.iota {dimensions = array<i32: 1>} : vector<8x32xi32>
    %2 = vector.broadcast %0 : vector<8x1xi32> to vector<8x32xi32>
    %3 = arith.cmpi eq, %2, %1 : vector<8x32xi32>
    %4 = arith.extui %3 : vector<8x32xi1> to vector<8x32xi32>
    %5 = arith.sitofp %4 : vector<8x32xi32> to vector<8x32xf32>
    %c0_1 = arith.constant 0 : index
    %c0_2 = arith.constant 0 : index
    %6 = vector.load %arg1[%c0_1, %c0_2] : memref<32x16xf32, #tpu.memory_space<vmem>>, vector<32x16xf32>
    %cst = arith.constant dense<0.000000e+00> : vector<8x16xf32>
    %7 = tpu.matmul %5, %6, %cst {dimension_numbers = #tpu.dot_dimension_numbers<[1], [0], [0], [1], [0, 0, 1, 1], [], []>} : vector<8x32xf32>, vector<32x16xf32>, vector<8x16xf32> -> vector<8x16xf32>
    %c0_3 = arith.constant 0 : index
    %c0_4 = arith.constant 0 : index
    %8 = vector.load %arg2[%c0_3, %c0_4] : memref<8x32xf32, #tpu.memory_space<vmem>>, vector<8x32xf32>
    %9 = tpu.concatenate %7, %8 in 1 : vector<8x16xf32>, vector<8x32xf32> -> vector<8x48xf32>
    %c0_5 = arith.constant 0 : index
    %c0_6 = arith.constant 0 : index
    %c0_7 = arith.constant 0 : index
    %10 = vector.load %arg3[%c0_5, %c0_6, %c0_7] : memref<4x8x32xf32, #tpu.memory_space<vmem>>, vector<1x8x32xf32>
    %11 = vector.shape_cast %10 : vector<1x8x32xf32> to vector<8x32xf32>
    %c0_8 = arith.constant 0 : index
    %c0_9 = arith.constant 0 : index
    %c0_10 = arith.constant 0 : index
    %12 = vector.load %arg7[%c0_8, %c0_9, %c0_10] : memref<4x32x128xf32, #tpu.memory_space<vmem>>, vector<1x32x128xf32>
    %13 = vector.shape_cast %12 : vector<1x32x128xf32> to vector<32x128xf32>
    %cst_11 = arith.constant dense<0.000000e+00> : vector<8x128xf32>
    %14 = tpu.matmul %11, %13, %cst_11 {dimension_numbers = #tpu.dot_dimension_numbers<[1], [0], [0], [1], [0, 0, 1, 1], [], []>} : vector<8x32xf32>, vector<32x128xf32>, vector<8x128xf32> -> vector<8x128xf32>
    %c0_12 = arith.constant 0 : index
    %c0_13 = arith.constant 0 : index
    %15 = vector.load %arg8[%c0_12, %c0_13] : memref<4x128xf32, #tpu.memory_space<vmem>>, vector<1x128xf32>
    %16 = vector.broadcast %15 : vector<1x128xf32> to vector<8x128xf32>
    %17 = arith.addf %14, %16 : vector<8x128xf32>
    %c1 = arith.constant 1 : index
    %c0_14 = arith.constant 0 : index
    %c0_15 = arith.constant 0 : index
    %18 = vector.load %arg3[%c1, %c0_14, %c0_15] : memref<4x8x32xf32, #tpu.memory_space<vmem>>, vector<1x8x32xf32>
    %19 = vector.shape_cast %18 : vector<1x8x32xf32> to vector<8x32xf32>
    %c1_16 = arith.constant 1 : index
    %c0_17 = arith.constant 0 : index
    %c0_18 = arith.constant 0 : index
    %20 = vector.load %arg7[%c1_16, %c0_17, %c0_18] : memref<4x32x128xf32, #tpu.memory_space<vmem>>, vector<1x32x128xf32>
    %21 = vector.shape_cast %20 : vector<1x32x128xf32> to vector<32x128xf32>
    %cst_19 = arith.constant dense<0.000000e+00> : vector<8x128xf32>
    %22 = tpu.matmul %19, %21, %cst_19 {dimension_numbers = #tpu.dot_dimension_numbers<[1], [0], [0], [1], [0, 0, 1, 1], [], []>} : vector<8x32xf32>, vector<32x128xf32>, vector<8x128xf32> -> vector<8x128xf32>
    %c1_20 = arith.constant 1 : index
    %c0_21 = arith.constant 0 : index
    %23 = vector.load %arg8[%c1_20, %c0_21] : memref<4x128xf32, #tpu.memory_space<vmem>>, vector<1x128xf32>
    %24 = vector.broadcast %23 : vector<1x128xf32> to vector<8x128xf32>
    %25 = arith.addf %22, %24 : vector<8x128xf32>
    %c2 = arith.constant 2 : index
    %c0_22 = arith.constant 0 : index
    %c0_23 = arith.constant 0 : index
    %26 = vector.load %arg3[%c2, %c0_22, %c0_23] : memref<4x8x32xf32, #tpu.memory_space<vmem>>, vector<1x8x32xf32>
    %27 = vector.shape_cast %26 : vector<1x8x32xf32> to vector<8x32xf32>
    %c2_24 = arith.constant 2 : index
    %c0_25 = arith.constant 0 : index
    %c0_26 = arith.constant 0 : index
    %28 = vector.load %arg7[%c2_24, %c0_25, %c0_26] : memref<4x32x128xf32, #tpu.memory_space<vmem>>, vector<1x32x128xf32>
    %29 = vector.shape_cast %28 : vector<1x32x128xf32> to vector<32x128xf32>
    %cst_27 = arith.constant dense<0.000000e+00> : vector<8x128xf32>
    %30 = tpu.matmul %27, %29, %cst_27 {dimension_numbers = #tpu.dot_dimension_numbers<[1], [0], [0], [1], [0, 0, 1, 1], [], []>} : vector<8x32xf32>, vector<32x128xf32>, vector<8x128xf32> -> vector<8x128xf32>
    %c2_28 = arith.constant 2 : index
    %c0_29 = arith.constant 0 : index
    %31 = vector.load %arg8[%c2_28, %c0_29] : memref<4x128xf32, #tpu.memory_space<vmem>>, vector<1x128xf32>
    %32 = vector.broadcast %31 : vector<1x128xf32> to vector<8x128xf32>
    %33 = arith.addf %30, %32 : vector<8x128xf32>
    %c3 = arith.constant 3 : index
    %c0_30 = arith.constant 0 : index
    %c0_31 = arith.constant 0 : index
    %34 = vector.load %arg3[%c3, %c0_30, %c0_31] : memref<4x8x32xf32, #tpu.memory_space<vmem>>, vector<1x8x32xf32>
    %35 = vector.shape_cast %34 : vector<1x8x32xf32> to vector<8x32xf32>
    %c3_32 = arith.constant 3 : index
    %c0_33 = arith.constant 0 : index
    %c0_34 = arith.constant 0 : index
    %36 = vector.load %arg7[%c3_32, %c0_33, %c0_34] : memref<4x32x128xf32, #tpu.memory_space<vmem>>, vector<1x32x128xf32>
    %37 = vector.shape_cast %36 : vector<1x32x128xf32> to vector<32x128xf32>
    %cst_35 = arith.constant dense<0.000000e+00> : vector<8x128xf32>
    %38 = tpu.matmul %35, %37, %cst_35 {dimension_numbers = #tpu.dot_dimension_numbers<[1], [0], [0], [1], [0, 0, 1, 1], [], []>} : vector<8x32xf32>, vector<32x128xf32>, vector<8x128xf32> -> vector<8x128xf32>
    %c3_36 = arith.constant 3 : index
    %c0_37 = arith.constant 0 : index
    %39 = vector.load %arg8[%c3_36, %c0_37] : memref<4x128xf32, #tpu.memory_space<vmem>>, vector<1x128xf32>
    %40 = vector.broadcast %39 : vector<1x128xf32> to vector<8x128xf32>
    %41 = arith.addf %38, %40 : vector<8x128xf32>
    %c0_38 = arith.constant 0 : index
    %c0_39 = arith.constant 0 : index
    %42 = vector.load %arg9[%c0_38, %c0_39] : memref<48x32xf32, #tpu.memory_space<vmem>>, vector<48x32xf32>
    %cst_40 = arith.constant dense<0.000000e+00> : vector<8x32xf32>
    %43 = tpu.matmul %9, %42, %cst_40 {dimension_numbers = #tpu.dot_dimension_numbers<[1], [0], [0], [1], [0, 0, 1, 1], [], []>} : vector<8x48xf32>, vector<48x32xf32>, vector<8x32xf32> -> vector<8x32xf32>
    %c0_41 = arith.constant 0 : index
    %c0_42 = arith.constant 0 : index
    %44 = vector.load %arg11[%c0_41, %c0_42] : memref<1x32xf32, #tpu.memory_space<vmem>>, vector<1x32xf32>
    %45 = vector.broadcast %44 : vector<1x32xf32> to vector<8x32xf32>
    %46 = arith.addf %43, %45 : vector<8x32xf32>
    %c0_43 = arith.constant 0 : index
    %c0_44 = arith.constant 0 : index
    %47 = vector.load %arg5[%c0_43, %c0_44] : memref<48x128xf32, #tpu.memory_space<vmem>>, vector<48x128xf32>
    %cst_45 = arith.constant dense<0.000000e+00> : vector<8x128xf32>
    %48 = tpu.matmul %9, %47, %cst_45 {dimension_numbers = #tpu.dot_dimension_numbers<[1], [0], [0], [1], [0, 0, 1, 1], [], []>} : vector<8x48xf32>, vector<48x128xf32>, vector<8x128xf32> -> vector<8x128xf32>
    %49 = arith.addf %48, %17 : vector<8x128xf32>
    %50 = math.tanh %49 : vector<8x128xf32>
    %cst_46 = arith.constant 5.000000e-01 : f32
    %51 = vector.broadcast %cst_46 : f32 to vector<8x128xf32>
    %52 = arith.mulf %51, %50 : vector<8x128xf32>
    %cst_47 = arith.constant 5.000000e-01 : f32
    %53 = vector.broadcast %cst_47 : f32 to vector<8x128xf32>
    %54 = arith.addf %53, %52 : vector<8x128xf32>
    %55 = vector.extract_strided_slice %54 {offsets = [0, 0], sizes = [8, 32], strides = [1, 1]} : vector<8x128xf32> to vector<8x32xf32>
    %56 = vector.extract_strided_slice %54 {offsets = [0, 32], sizes = [8, 32], strides = [1, 1]} : vector<8x128xf32> to vector<8x32xf32>
    %57 = vector.extract_strided_slice %50 {offsets = [0, 64], sizes = [8, 32], strides = [1, 1]} : vector<8x128xf32> to vector<8x32xf32>
    %58 = vector.extract_strided_slice %54 {offsets = [0, 96], sizes = [8, 32], strides = [1, 1]} : vector<8x128xf32> to vector<8x32xf32>
    %c0_48 = arith.constant 0 : index
    %c0_49 = arith.constant 0 : index
    %c0_50 = arith.constant 0 : index
    %59 = vector.load %arg4[%c0_48, %c0_49, %c0_50] : memref<4x8x32xf32, #tpu.memory_space<vmem>>, vector<1x8x32xf32>
    %60 = vector.shape_cast %59 : vector<1x8x32xf32> to vector<8x32xf32>
    %61 = arith.mulf %56, %60 : vector<8x32xf32>
    %62 = arith.mulf %55, %57 : vector<8x32xf32>
    %63 = arith.addf %61, %62 : vector<8x32xf32>
    %64 = math.tanh %63 : vector<8x32xf32>
    %65 = arith.mulf %58, %64 : vector<8x32xf32>
    %c0_51 = arith.constant 0 : index
    %c0_52 = arith.constant 0 : index
    %c0_53 = arith.constant 0 : index
    %66 = vector.load %arg13[%c0_51, %c0_52, %c0_53] : memref<4x8x32xf32, #tpu.memory_space<vmem>>, vector<1x8x32xf32>
    %67 = vector.shape_cast %66 : vector<1x8x32xf32> to vector<8x32xf32>
    %68 = vector.shape_cast %65 : vector<8x32xf32> to vector<1x8x32xf32>
    tpu.vector_store %arg13[%c0_51, %c0_52, %c0_53], %68 {strides = array<i32>} : memref<4x8x32xf32, #tpu.memory_space<vmem>>, vector<1x8x32xf32>,
    %c0_54 = arith.constant 0 : index
    %c0_55 = arith.constant 0 : index
    %c0_56 = arith.constant 0 : index
    %69 = vector.load %arg14[%c0_54, %c0_55, %c0_56] : memref<4x8x32xf32, #tpu.memory_space<vmem>>, vector<1x8x32xf32>
    %70 = vector.shape_cast %69 : vector<1x8x32xf32> to vector<8x32xf32>
    %71 = vector.shape_cast %63 : vector<8x32xf32> to vector<1x8x32xf32>
    tpu.vector_store %arg14[%c0_54, %c0_55, %c0_56], %71 {strides = array<i32>} : memref<4x8x32xf32, #tpu.memory_space<vmem>>, vector<1x8x32xf32>,
    %c0_57 = arith.constant 0 : index
    %c0_58 = arith.constant 0 : index
    %c0_59 = arith.constant 0 : index
    %72 = vector.load %arg6[%c0_57, %c0_58, %c0_59] : memref<3x32x128xf32, #tpu.memory_space<vmem>>, vector<1x32x128xf32>
    %73 = vector.shape_cast %72 : vector<1x32x128xf32> to vector<32x128xf32>
    %cst_60 = arith.constant dense<0.000000e+00> : vector<8x128xf32>
    %74 = tpu.matmul %65, %73, %cst_60 {dimension_numbers = #tpu.dot_dimension_numbers<[1], [0], [0], [1], [0, 0, 1, 1], [], []>} : vector<8x32xf32>, vector<32x128xf32>, vector<8x128xf32> -> vector<8x128xf32>
    %75 = arith.addf %74, %25 : vector<8x128xf32>
    %76 = math.tanh %75 : vector<8x128xf32>
    %cst_61 = arith.constant 5.000000e-01 : f32
    %77 = vector.broadcast %cst_61 : f32 to vector<8x128xf32>
    %78 = arith.mulf %77, %76 : vector<8x128xf32>
    %cst_62 = arith.constant 5.000000e-01 : f32
    %79 = vector.broadcast %cst_62 : f32 to vector<8x128xf32>
    %80 = arith.addf %79, %78 : vector<8x128xf32>
    %81 = vector.extract_strided_slice %80 {offsets = [0, 0], sizes = [8, 32], strides = [1, 1]} : vector<8x128xf32> to vector<8x32xf32>
    %82 = vector.extract_strided_slice %80 {offsets = [0, 32], sizes = [8, 32], strides = [1, 1]} : vector<8x128xf32> to vector<8x32xf32>
    %83 = vector.extract_strided_slice %76 {offsets = [0, 64], sizes = [8, 32], strides = [1, 1]} : vector<8x128xf32> to vector<8x32xf32>
    %84 = vector.extract_strided_slice %80 {offsets = [0, 96], sizes = [8, 32], strides = [1, 1]} : vector<8x128xf32> to vector<8x32xf32>
    %c1_63 = arith.constant 1 : index
    %c0_64 = arith.constant 0 : index
    %c0_65 = arith.constant 0 : index
    %85 = vector.load %arg4[%c1_63, %c0_64, %c0_65] : memref<4x8x32xf32, #tpu.memory_space<vmem>>, vector<1x8x32xf32>
    %86 = vector.shape_cast %85 : vector<1x8x32xf32> to vector<8x32xf32>
    %87 = arith.mulf %82, %86 : vector<8x32xf32>
    %88 = arith.mulf %81, %83 : vector<8x32xf32>
    %89 = arith.addf %87, %88 : vector<8x32xf32>
    %90 = math.tanh %89 : vector<8x32xf32>
    %91 = arith.mulf %84, %90 : vector<8x32xf32>
    %c1_66 = arith.constant 1 : index
    %c0_67 = arith.constant 0 : index
    %c0_68 = arith.constant 0 : index
    %92 = vector.load %arg13[%c1_66, %c0_67, %c0_68] : memref<4x8x32xf32, #tpu.memory_space<vmem>>, vector<1x8x32xf32>
    %93 = vector.shape_cast %92 : vector<1x8x32xf32> to vector<8x32xf32>
    %94 = vector.shape_cast %91 : vector<8x32xf32> to vector<1x8x32xf32>
    tpu.vector_store %arg13[%c1_66, %c0_67, %c0_68], %94 {strides = array<i32>} : memref<4x8x32xf32, #tpu.memory_space<vmem>>, vector<1x8x32xf32>,
    %c1_69 = arith.constant 1 : index
    %c0_70 = arith.constant 0 : index
    %c0_71 = arith.constant 0 : index
    %95 = vector.load %arg14[%c1_69, %c0_70, %c0_71] : memref<4x8x32xf32, #tpu.memory_space<vmem>>, vector<1x8x32xf32>
    %96 = vector.shape_cast %95 : vector<1x8x32xf32> to vector<8x32xf32>
    %97 = vector.shape_cast %89 : vector<8x32xf32> to vector<1x8x32xf32>
    tpu.vector_store %arg14[%c1_69, %c0_70, %c0_71], %97 {strides = array<i32>} : memref<4x8x32xf32, #tpu.memory_space<vmem>>, vector<1x8x32xf32>,
    %c1_72 = arith.constant 1 : index
    %c0_73 = arith.constant 0 : index
    %c0_74 = arith.constant 0 : index
    %98 = vector.load %arg6[%c1_72, %c0_73, %c0_74] : memref<3x32x128xf32, #tpu.memory_space<vmem>>, vector<1x32x128xf32>
    %99 = vector.shape_cast %98 : vector<1x32x128xf32> to vector<32x128xf32>
    %cst_75 = arith.constant dense<0.000000e+00> : vector<8x128xf32>
    %100 = tpu.matmul %91, %99, %cst_75 {dimension_numbers = #tpu.dot_dimension_numbers<[1], [0], [0], [1], [0, 0, 1, 1], [], []>} : vector<8x32xf32>, vector<32x128xf32>, vector<8x128xf32> -> vector<8x128xf32>
    %101 = arith.addf %100, %33 : vector<8x128xf32>
    %102 = math.tanh %101 : vector<8x128xf32>
    %cst_76 = arith.constant 5.000000e-01 : f32
    %103 = vector.broadcast %cst_76 : f32 to vector<8x128xf32>
    %104 = arith.mulf %103, %102 : vector<8x128xf32>
    %cst_77 = arith.constant 5.000000e-01 : f32
    %105 = vector.broadcast %cst_77 : f32 to vector<8x128xf32>
    %106 = arith.addf %105, %104 : vector<8x128xf32>
    %107 = vector.extract_strided_slice %106 {offsets = [0, 0], sizes = [8, 32], strides = [1, 1]} : vector<8x128xf32> to vector<8x32xf32>
    %108 = vector.extract_strided_slice %106 {offsets = [0, 32], sizes = [8, 32], strides = [1, 1]} : vector<8x128xf32> to vector<8x32xf32>
    %109 = vector.extract_strided_slice %102 {offsets = [0, 64], sizes = [8, 32], strides = [1, 1]} : vector<8x128xf32> to vector<8x32xf32>
    %110 = vector.extract_strided_slice %106 {offsets = [0, 96], sizes = [8, 32], strides = [1, 1]} : vector<8x128xf32> to vector<8x32xf32>
    %c2_78 = arith.constant 2 : index
    %c0_79 = arith.constant 0 : index
    %c0_80 = arith.constant 0 : index
    %111 = vector.load %arg4[%c2_78, %c0_79, %c0_80] : memref<4x8x32xf32, #tpu.memory_space<vmem>>, vector<1x8x32xf32>
    %112 = vector.shape_cast %111 : vector<1x8x32xf32> to vector<8x32xf32>
    %113 = arith.mulf %108, %112 : vector<8x32xf32>
    %114 = arith.mulf %107, %109 : vector<8x32xf32>
    %115 = arith.addf %113, %114 : vector<8x32xf32>
    %116 = math.tanh %115 : vector<8x32xf32>
    %117 = arith.mulf %110, %116 : vector<8x32xf32>
    %c2_81 = arith.constant 2 : index
    %c0_82 = arith.constant 0 : index
    %c0_83 = arith.constant 0 : index
    %118 = vector.load %arg13[%c2_81, %c0_82, %c0_83] : memref<4x8x32xf32, #tpu.memory_space<vmem>>, vector<1x8x32xf32>
    %119 = vector.shape_cast %118 : vector<1x8x32xf32> to vector<8x32xf32>
    %120 = vector.shape_cast %117 : vector<8x32xf32> to vector<1x8x32xf32>
    tpu.vector_store %arg13[%c2_81, %c0_82, %c0_83], %120 {strides = array<i32>} : memref<4x8x32xf32, #tpu.memory_space<vmem>>, vector<1x8x32xf32>,
    %c2_84 = arith.constant 2 : index
    %c0_85 = arith.constant 0 : index
    %c0_86 = arith.constant 0 : index
    %121 = vector.load %arg14[%c2_84, %c0_85, %c0_86] : memref<4x8x32xf32, #tpu.memory_space<vmem>>, vector<1x8x32xf32>
    %122 = vector.shape_cast %121 : vector<1x8x32xf32> to vector<8x32xf32>
    %123 = vector.shape_cast %115 : vector<8x32xf32> to vector<1x8x32xf32>
    tpu.vector_store %arg14[%c2_84, %c0_85, %c0_86], %123 {strides = array<i32>} : memref<4x8x32xf32, #tpu.memory_space<vmem>>, vector<1x8x32xf32>,
    %c2_87 = arith.constant 2 : index
    %c0_88 = arith.constant 0 : index
    %c0_89 = arith.constant 0 : index
    %124 = vector.load %arg6[%c2_87, %c0_88, %c0_89] : memref<3x32x128xf32, #tpu.memory_space<vmem>>, vector<1x32x128xf32>
    %125 = vector.shape_cast %124 : vector<1x32x128xf32> to vector<32x128xf32>
    %cst_90 = arith.constant dense<0.000000e+00> : vector<8x128xf32>
    %126 = tpu.matmul %117, %125, %cst_90 {dimension_numbers = #tpu.dot_dimension_numbers<[1], [0], [0], [1], [0, 0, 1, 1], [], []>} : vector<8x32xf32>, vector<32x128xf32>, vector<8x128xf32> -> vector<8x128xf32>
    %127 = arith.addf %126, %41 : vector<8x128xf32>
    %128 = math.tanh %127 : vector<8x128xf32>
    %cst_91 = arith.constant 5.000000e-01 : f32
    %129 = vector.broadcast %cst_91 : f32 to vector<8x128xf32>
    %130 = arith.mulf %129, %128 : vector<8x128xf32>
    %cst_92 = arith.constant 5.000000e-01 : f32
    %131 = vector.broadcast %cst_92 : f32 to vector<8x128xf32>
    %132 = arith.addf %131, %130 : vector<8x128xf32>
    %133 = vector.extract_strided_slice %132 {offsets = [0, 0], sizes = [8, 32], strides = [1, 1]} : vector<8x128xf32> to vector<8x32xf32>
    %134 = vector.extract_strided_slice %132 {offsets = [0, 32], sizes = [8, 32], strides = [1, 1]} : vector<8x128xf32> to vector<8x32xf32>
    %135 = vector.extract_strided_slice %128 {offsets = [0, 64], sizes = [8, 32], strides = [1, 1]} : vector<8x128xf32> to vector<8x32xf32>
    %136 = vector.extract_strided_slice %132 {offsets = [0, 96], sizes = [8, 32], strides = [1, 1]} : vector<8x128xf32> to vector<8x32xf32>
    %c3_93 = arith.constant 3 : index
    %c0_94 = arith.constant 0 : index
    %c0_95 = arith.constant 0 : index
    %137 = vector.load %arg4[%c3_93, %c0_94, %c0_95] : memref<4x8x32xf32, #tpu.memory_space<vmem>>, vector<1x8x32xf32>
    %138 = vector.shape_cast %137 : vector<1x8x32xf32> to vector<8x32xf32>
    %139 = arith.mulf %134, %138 : vector<8x32xf32>
    %140 = arith.mulf %133, %135 : vector<8x32xf32>
    %141 = arith.addf %139, %140 : vector<8x32xf32>
    %142 = math.tanh %141 : vector<8x32xf32>
    %143 = arith.mulf %136, %142 : vector<8x32xf32>
    %c3_96 = arith.constant 3 : index
    %c0_97 = arith.constant 0 : index
    %c0_98 = arith.constant 0 : index
    %144 = vector.load %arg13[%c3_96, %c0_97, %c0_98] : memref<4x8x32xf32, #tpu.memory_space<vmem>>, vector<1x8x32xf32>
    %145 = vector.shape_cast %144 : vector<1x8x32xf32> to vector<8x32xf32>
    %146 = vector.shape_cast %143 : vector<8x32xf32> to vector<1x8x32xf32>
    tpu.vector_store %arg13[%c3_96, %c0_97, %c0_98], %146 {strides = array<i32>} : memref<4x8x32xf32, #tpu.memory_space<vmem>>, vector<1x8x32xf32>,
    %c3_99 = arith.constant 3 : index
    %c0_100 = arith.constant 0 : index
    %c0_101 = arith.constant 0 : index
    %147 = vector.load %arg14[%c3_99, %c0_100, %c0_101] : memref<4x8x32xf32, #tpu.memory_space<vmem>>, vector<1x8x32xf32>
    %148 = vector.shape_cast %147 : vector<1x8x32xf32> to vector<8x32xf32>
    %149 = vector.shape_cast %141 : vector<8x32xf32> to vector<1x8x32xf32>
    tpu.vector_store %arg14[%c3_99, %c0_100, %c0_101], %149 {strides = array<i32>} : memref<4x8x32xf32, #tpu.memory_space<vmem>>, vector<1x8x32xf32>,
    %c0_102 = arith.constant 0 : index
    %c0_103 = arith.constant 0 : index
    %150 = vector.load %arg10[%c0_102, %c0_103] : memref<32x32xf32, #tpu.memory_space<vmem>>, vector<32x32xf32>
    %cst_104 = arith.constant dense<0.000000e+00> : vector<8x32xf32>
    %151 = tpu.matmul %143, %150, %cst_104 {dimension_numbers = #tpu.dot_dimension_numbers<[1], [0], [0], [1], [0, 0, 1, 1], [], []>} : vector<8x32xf32>, vector<32x32xf32>, vector<8x32xf32> -> vector<8x32xf32>
    %152 = arith.addf %46, %151 : vector<8x32xf32>
    %c0_105 = arith.constant 0 : index
    %c0_106 = arith.constant 0 : index
    %153 = vector.load %arg12[%c0_105, %c0_106] : memref<8x32xf32, #tpu.memory_space<vmem>>, vector<8x32xf32>
    tpu.vector_store %arg12[%c0_105, %c0_106], %152 {strides = array<i32>} : memref<8x32xf32, #tpu.memory_space<vmem>>, vector<8x32xf32>,
    return
  }
}

</mosaic_0001>

<llo_original>
// kernel: decoder_forward.1
$region0: #{decoder_forward.1}
  #allocation0 [shape = 'u32[]', space=smem, size = 0x4, offset = 0x4, fixed_abs, tag = 'smem constant byte address 0x4 - core index']
  #allocation1 [shape = 'u32[144,128]{1,0:T(1,128)}', space=vmem, size = 0x12000, scoped, tag = 'internal scratch']
  %s0 = inlined_call_operand.vmem [shape: s32[8,1], index: 0, kind: input, shape index: {}]
  %s1 = inlined_call_operand.vmem [shape: f32[32,16], index: 1, kind: input, shape index: {}]
  %s2 = inlined_call_operand.vmem [shape: f32[8,32], index: 2, kind: input, shape index: {}]
  %s3 = inlined_call_operand.vmem [shape: f32[4,8,32], index: 3, kind: input, shape index: {}]
  %s4 = inlined_call_operand.hbm [shape: f32[4,8,32], index: 4, kind: input, shape index: {}]
  %s5 = inlined_call_operand.hbm [shape: f32[48,128], index: 5, kind: input, shape index: {}]
  %s6 = inlined_call_operand.hbm [shape: f32[3,32,128], index: 6, kind: input, shape index: {}]
  %s7 = inlined_call_operand.vmem [shape: f32[4,32,128], index: 7, kind: input, shape index: {}]
  %s8 = inlined_call_operand.hbm [shape: f32[4,128], index: 8, kind: input, shape index: {}]
  %s9 = inlined_call_operand.vmem [shape: f32[48,32], index: 9, kind: input, shape index: {}]
  %s10 = inlined_call_operand.hbm [shape: f32[32,32], index: 10, kind: input, shape index: {}]
  %s11 = inlined_call_operand.vmem [shape: f32[1,32], index: 11, kind: input, shape index: {}]
  %s12 = inlined_call_operand.hbm [shape: f32[8,32], index: 12, kind: output, shape index: {0}]
  %s13 = inlined_call_operand.hbm [shape: f32[4,8,32], index: 13, kind: output, shape index: {1}]
  %s14 = inlined_call_operand.hbm [shape: f32[4,8,32], index: 14, kind: output, shape index: {2}]
  %15 = xla_tuple %s12, %s13, %s14
  %s16 = sld [smem:[#allocation0]]
  $region94: #{decoder_forward.1} parent=0
    _
  %s18 = ssub.s32 1, %s16
  %s19 = scalar_select 0, %s18, %s16
  $region1: #{decoder_forward.1} parent=0
    #allocation2 [shape = 'u8[16384]{0}', space=vmem, size = 0x4000, scoped, tag = 'input window, operand 4, single buffered']
    #allocation3 [shape = 's32[1]{0}', space=sflag, size = 0x4, scoped, tag = 'scoped memory for decoder_forward.1']
    #allocation4 [shape = 's32[1]{0}', space=sflag, size = 0x4, scoped, tag = 'scoped memory for decoder_forward.1']
    #allocation5 [shape = 'u8[24576]{0}', space=vmem, size = 0x6000, scoped, tag = 'input window, operand 5, single buffered']
    #allocation6 [shape = 's32[1]{0}', space=sflag, size = 0x4, scoped, tag = 'scoped memory for decoder_forward.1']
    #allocation7 [shape = 'u8[49152]{0}', space=vmem, size = 0xc000, scoped, tag = 'input window, operand 6, single buffered']
    #allocation8 [shape = 'u8[2048]{0}', space=vmem, size = 0x800, scoped, tag = 'input window, operand 8, single buffered']
    #allocation9 [shape = 's32[1]{0}', space=sflag, size = 0x4, scoped, tag = 'scoped memory for decoder_forward.1']
    #allocation10 [shape = 'u8[16384]{0}', space=vmem, size = 0x4000, scoped, tag = 'input window, operand 10, single buffered']
    #allocation11 [shape = 'u8[4096]{0}', space=vmem, size = 0x1000, scoped, tag = 'output window, operand 0, single buffered']
    #allocation12 [shape = 'u8[16384]{0}', space=vmem, size = 0x4000, scoped, tag = 'output window, operand 1, single buffered']
    #allocation13 [shape = 's32[1]{0}', space=sflag, size = 0x4, scoped, tag = 'scoped memory for decoder_forward.1']
    #allocation14 [shape = 'u8[16384]{0}', space=vmem, size = 0x4000, scoped, tag = 'output window, operand 2, single buffered']
    %20 = vsyncpa [#allocation3], 0
    %21 = vsyncpa [#allocation6], 0
    %22 = vsyncpa [#allocation9], 0
    %23 = vsyncpa [#allocation4], 0
    %24 = vsyncpa [#allocation13], 0
    // Predicated region
    $region2: #{decoder_forward.1} parent=1 // pred_check
      _
    $region3: #{decoder_forward.1} parent=1 // pred_check_branch
      %26 = sbr.rel (0) target = $region5
    $region4: #{decoder_forward.1} parent=1 // pred_region
      _
    $region5: #{decoder_forward.1} parent=1 // pred_fallthru
      _
    // Predicated region
    $region6: #{decoder_forward.1} parent=1 // pred_check
      _
    $region7: #{decoder_forward.1} parent=1 // pred_check_branch
      %28 = sbr.rel (0) target = $region9
    $region8: #{decoder_forward.1} parent=1 // pred_region
      _
    $region9: #{decoder_forward.1} parent=1 // pred_fallthru
      _
    // Predicated region
    $region10: #{decoder_forward.1} parent=1 // pred_check
      _
    $region11: #{decoder_forward.1} parent=1 // pred_check_branch
      %30 = sbr.rel (0) target = $region13
    $region12: #{decoder_forward.1} parent=1 // pred_region
      _
    $region13: #{decoder_forward.1} parent=1 // pred_fallthru
      _
    // Predicated region
    $region14: #{decoder_forward.1} parent=1 // pred_check
      _
    $region15: #{decoder_forward.1} parent=1 // pred_check_branch
      %32 = sbr.rel (0) target = $region17
    $region16: #{decoder_forward.1} parent=1 // pred_region
      _
    $region17: #{decoder_forward.1} parent=1 // pred_fallthru
      _
    // Predicated region
    $region18: #{decoder_forward.1} parent=1 // pred_check
      _
    $region19: #{decoder_forward.1} parent=1 // pred_check_branch
      %34 = sbr.rel (0) target = $region21
    $region20: #{decoder_forward.1} parent=1 // pred_region
      %s36 = ssub.s32 512, 512
      %37 = vsyncadd [#allocation3], %s36
      %s38 = sshll.u32 [#allocation2], 4
      %s39 = int_to_ptr.vmem [resolvable:$true] %s38
      %44 = dma.hbm_to_vmem [thread:$0]  %s4, 512, %s39, [#allocation3], 128, 128, 8
    $region21: #{decoder_forward.1} parent=1 // pred_fallthru
      _
    // Predicated region
    $region22: #{decoder_forward.1} parent=1 // pred_check
      _
    $region23: #{decoder_forward.1} parent=1 // pred_check_branch
      %46 = sbr.rel (0) target = $region25
    $region24: #{decoder_forward.1} parent=1 // pred_region
      %s48 = ssub.s32 768, 768
      %49 = vsyncadd [#allocation6], %s48
      %s50 = sshll.u32 [#allocation5], 4
      %s51 = int_to_ptr.vmem [resolvable:$true] %s50
      %56 = dma.hbm_to_vmem [thread:$0]  %s5, 768, %s51, [#allocation6], 128, 128, 8
    $region25: #{decoder_forward.1} parent=1 // pred_fallthru
      _
    // Predicated region
    $region26: #{decoder_forward.1} parent=1 // pred_check
      _
    $region27: #{decoder_forward.1} parent=1 // pred_check_branch
      %58 = sbr.rel (0) target = $region29
    $region28: #{decoder_forward.1} parent=1 // pred_region
      %s60 = ssub.s32 1536, 1536
      %61 = vsyncadd [#allocation6], %s60
      %s62 = sshll.u32 [#allocation7], 4
      %s63 = int_to_ptr.vmem [resolvable:$true] %s62
      %68 = dma.hbm_to_vmem [thread:$0]  %s6, 1536, %s63, [#allocation6], 128, 128, 8
    $region29: #{decoder_forward.1} parent=1 // pred_fallthru
      _
    // Predicated region
    $region30: #{decoder_forward.1} parent=1 // pred_check
      _
    $region31: #{decoder_forward.1} parent=1 // pred_check_branch
      %70 = sbr.rel (0) target = $region33
    $region32: #{decoder_forward.1} parent=1 // pred_region
      _
    $region33: #{decoder_forward.1} parent=1 // pred_fallthru
      _
    // Predicated region
    $region34: #{decoder_forward.1} parent=1 // pred_check
      _
    $region35: #{decoder_forward.1} parent=1 // pred_check_branch
      %72 = sbr.rel (0) target = $region37
    $region36: #{decoder_forward.1} parent=1 // pred_region
      %s74 = ssub.s32 64, 64
      %75 = vsyncadd [#allocation9], %s74
      %s77 = sshll.u32 [#allocation8], 4
      %s78 = int_to_ptr.vmem [resolvable:$true] %s77
      %80 = dma.hbm_to_vmem [thread:$0]  %s8, 64, %s78, [#allocation9]
    $region37: #{decoder_forward.1} parent=1 // pred_fallthru
      _
    // Predicated region
    $region38: #{decoder_forward.1} parent=1 // pred_check
      _
    $region39: #{decoder_forward.1} parent=1 // pred_check_branch
      %82 = sbr.rel (0) target = $region41
    $region40: #{decoder_forward.1} parent=1 // pred_region
      _
    $region41: #{decoder_forward.1} parent=1 // pred_fallthru
      _
    // Predicated region
    $region42: #{decoder_forward.1} parent=1 // pred_check
      _
    $region43: #{decoder_forward.1} parent=1 // pred_check_branch
      %84 = sbr.rel (0) target = $region45
    $region44: #{decoder_forward.1} parent=1 // pred_region
      %s86 = ssub.s32 512, 512
      %87 = vsyncadd [#allocation9], %s86
      %s88 = sshll.u32 [#allocation10], 4
      %s89 = int_to_ptr.vmem [resolvable:$true] %s88
      %94 = dma.hbm_to_vmem [thread:$0]  %s10, 512, %s89, [#allocation9], 128, 128, 8
    $region45: #{decoder_forward.1} parent=1 // pred_fallthru
      _
    // Predicated region
    $region46: #{decoder_forward.1} parent=1 // pred_check
      _
    $region47: #{decoder_forward.1} parent=1 // pred_check_branch
      %96 = sbr.rel (0) target = $region49
    $region48: #{decoder_forward.1} parent=1 // pred_region
      _
    $region49: #{decoder_forward.1} parent=1 // pred_fallthru
      _
    // Predicated region
    $region50: #{decoder_forward.1} parent=1 // pred_check
      _
    $region51: #{decoder_forward.1} parent=1 // pred_check_branch
      %98 = sbr.rel (0) target = $region53
    $region52: #{decoder_forward.1} parent=1 // pred_region
      %99 = dma.done [#allocation3], 512
    $region53: #{decoder_forward.1} parent=1 // pred_fallthru
      _
    // Predicated region
    $region54: #{decoder_forward.1} parent=1 // pred_check
      _
    $region55: #{decoder_forward.1} parent=1 // pred_check_branch
      %101 = sbr.rel (0) target = $region57
    $region56: #{decoder_forward.1} parent=1 // pred_region
      %102 = dma.done [#allocation6], 768
    $region57: #{decoder_forward.1} parent=1 // pred_fallthru
      _
    // Predicated region
    $region58: #{decoder_forward.1} parent=1 // pred_check
      _
    $region59: #{decoder_forward.1} parent=1 // pred_check_branch
      %104 = sbr.rel (0) target = $region61
    $region60: #{decoder_forward.1} parent=1 // pred_region
      %105 = dma.done [#allocation6], 1536
    $region61: #{decoder_forward.1} parent=1 // pred_fallthru
      _
    // Predicated region
    $region62: #{decoder_forward.1} parent=1 // pred_check
      _
    $region63: #{decoder_forward.1} parent=1 // pred_check_branch
      %107 = sbr.rel (0) target = $region65
    $region64: #{decoder_forward.1} parent=1 // pred_region
      %108 = dma.done [#allocation9], 64
    $region65: #{decoder_forward.1} parent=1 // pred_fallthru
      _
    // Predicated region
    $region66: #{decoder_forward.1} parent=1 // pred_check
      _
    $region67: #{decoder_forward.1} parent=1 // pred_check_branch
      %110 = sbr.rel (0) target = $region69
    $region68: #{decoder_forward.1} parent=1 // pred_region
      %111 = dma.done [#allocation9], 512
    $region69: #{decoder_forward.1} parent=1 // pred_fallthru
      _
    %v112 = vld [vmem:[%s0] sm:$0xff]
    %v113 = vlaneseq
    %v114 = vand.u32 %v113, 127
    %115 = vset.pattern.permute.xlu0 0
    %116 = vperm.xlu0 %115, %v112
    %v117 = vpop.permute.xlu0 %116
    %vm118 = vcmp.eq.s32.totalorder %v117, %v114
    %v119 = vsel %vm118, 1, 0
    %v120 = vcvt.s32.f32 %v119
    %v121 = vld [vmem:[%s1] sm:$0xff]
    %v122 = vld [vmem:[%s1 + $0x8] sm:$0xff]
    %v123 = vld [vmem:[%s1 + $0x10] sm:$0xff]
    %v124 = vld [vmem:[%s1 + $0x18] sm:$0xff]
    %vm125 = vcmask 261120
    %v127 = vsel %vm125, %v120, 0
    %129 = vmatprep.subr.mxu0 0.0
    %130 = vmatpush1.msra.mxu0 %v121
    %131 = vmatprep.subr.mxu0 0.0
    %132 = vmatpush1.msra.mxu0 %v122
    %133 = vmatprep.subr.mxu0 0.0
    %134 = vmatpush1.msra.mxu0 %v123
    %135 = vmatprep.subr.mxu0 0.0
    %136 = vmatpush1.msra.mxu0 %v124
    %137 = vmatprep.subr.mxu0 0.0
    %138 = vmatpush1.msra.mxu0 0.0
    %139 = vmatprep.subr.mxu0 0.0
    %140 = vmatpush1.msra.mxu0 0.0
    %141 = vmatprep.subr.mxu0 0.0
    %142 = vmatpush1.msra.mxu0 0.0
    %143 = vmatprep.subr.mxu0 0.0
    %144 = vmatpush1.msra.mxu0 0.0
    %145 = vmatprep.subr.mxu0 0.0
    %146 = vmatpush1.msra.mxu0 0.0
    %147 = vmatprep.subr.mxu0 0.0
    %148 = vmatpush1.msra.mxu0 0.0
    %149 = vmatprep.subr.mxu0 0.0
    %150 = vmatpush1.msra.mxu0 0.0
    %151 = vmatprep.subr.mxu0 0.0
    %152 = vmatpush1.msra.mxu0 0.0
    %153 = vmatprep.subr.mxu0 0.0
    %154 = vmatpush1.msra.mxu0 0.0
    %155 = vmatprep.subr.mxu0 0.0
    %156 = vmatpush1.msra.mxu0 0.0
    %157 = vmatprep.subr.mxu0 0.0
    %158 = vmatpush1.msra.mxu0 0.0
    %159 = vmatprep.subr.mxu0 0.0
    %160 = vmatpush1.msra.mxu0 0.0
    %161 = vmatprep.subr.mxu0 0.0
    %162 = vmatpush1.msra.mxu0 0.0
    %163 = vmatprep.subr.mxu0 0.0
    %164 = vmatpush1.msra.mxu0 0.0
    %165 = vmatprep.subr.mxu0 0.0
    %166 = vmatpush1.msra.mxu0 0.0
    %167 = vmatprep.subr.mxu0 0.0
    %168 = vmatpush1.msra.mxu0 0.0
    %169 = vmatprep.subr.mxu0 0.0
    %170 = vmatpush1.msra.mxu0 0.0
    %171 = vmatprep.subr.mxu0 0.0
    %172 = vmatpush1.msra.mxu0 0.0
    %173 = vmatprep.subr.mxu0 0.0
    %174 = vmatpush1.msra.mxu0 0.0
    %175 = vmatprep.subr.mxu0 0.0
    %176 = vmatpush1.msra.mxu0 0.0
    %177 = vmatprep.subr.mxu0 0.0
    %178 = vmatpush1.msra.mxu0 0.0
    %179 = vmatprep.subr.mxu0 0.0
    %180 = vmatpush1.msra.mxu0 0.0
    %181 = vmatprep.subr.mxu0 0.0
    %182 = vmatpush1.msra.mxu0 0.0
    %183 = vmatprep.subr.mxu0 0.0
    %184 = vmatpush1.msra.mxu0 0.0
    %185 = vmatprep.subr.mxu0 0.0
    %186 = vmatpush1.msra.mxu0 0.0
    %187 = vmatprep.subr.mxu0 0.0
    %188 = vmatpush1.msra.mxu0 0.0
    %189 = vmatprep.subr.mxu0 0.0
    %190 = vmatpush1.msra.mxu0 0.0
    %191 = vmatprep.subr.mxu0 0.0
    %192 = vmatpush1.msra.mxu0 0.0
    %193 = vmatprep.mubr.f32.mxu0 0.0
    %194 = vmatmul.mubr.f32.gmra.mrb[0].mxu0 %v127
    %v195 = vpop.f32.mrb[0].mxu0
    %v196 = vadd.f32 0.0, %v195
    %v197 = vpop.f32.mrb[0].mxu0
    %198 = vdwg.mxu0
    %v199 = vld [vmem:[%s2] sm:$0xff]
    %201 = vrot.lane.b32.xlu0 %v199, 16
    %v202 = vpop.permute.xlu0 %201
    %vm204 = vcmask 130048
    %v205 = vsel %vm204, %v196, %v202
    %v206 = vld [vmem:[%s3] sm:$0xff]
    %v207 = vld [vmem:[%s7] sm:$0xff]
    %v208 = vld [vmem:[%s7 + $0x8] sm:$0xff]
    %v209 = vld [vmem:[%s7 + $0x10] sm:$0xff]
    %v210 = vld [vmem:[%s7 + $0x18] sm:$0xff]
    %v211 = vld [vmem:[#allocation8] sm:$0x1]
    %v212 = vlaneseq
    %v213 = vshrl.u32 %v212, 7
    %v214 = vsub.s32 0, %v213
    %v215 = vrot.slane %v211, %v214
    %v217 = vsel %vm125, %v206, 0
    %219 = vmatprep.subr.mxu0 0.0
    %220 = vmatpush1.msra.mxu0 %v207
    %221 = vmatprep.subr.mxu0 0.0
    %222 = vmatpush1.msra.mxu0 %v208
    %223 = vmatprep.subr.mxu0 0.0
    %224 = vmatpush1.msra.mxu0 %v209
    %225 = vmatprep.subr.mxu0 0.0
    %226 = vmatpush1.msra.mxu0 %v210
    %227 = vmatprep.subr.mxu0 0.0
    %228 = vmatpush1.msra.mxu0 0.0
    %229 = vmatprep.subr.mxu0 0.0
    %230 = vmatpush1.msra.mxu0 0.0
    %231 = vmatprep.subr.mxu0 0.0
    %232 = vmatpush1.msra.mxu0 0.0
    %233 = vmatprep.subr.mxu0 0.0
    %234 = vmatpush1.msra.mxu0 0.0
    %235 = vmatprep.subr.mxu0 0.0
    %236 = vmatpush1.msra.mxu0 0.0
    %237 = vmatprep.subr.mxu0 0.0
    %238 = vmatpush1.msra.mxu0 0.0
    %239 = vmatprep.subr.mxu0 0.0
    %240 = vmatpush1.msra.mxu0 0.0
    %241 = vmatprep.subr.mxu0 0.0
    %242 = vmatpush1.msra.mxu0 0.0
    %243 = vmatprep.subr.mxu0 0.0
    %244 = vmatpush1.msra.mxu0 0.0
    %245 = vmatprep.subr.mxu0 0.0
    %246 = vmatpush1.msra.mxu0 0.0
    %247 = vmatprep.subr.mxu0 0.0
    %248 = vmatpush1.msra.mxu0 0.0
    %249 = vmatprep.subr.mxu0 0.0
    %250 = vmatpush1.msra.mxu0 0.0
    %251 = vmatprep.subr.mxu0 0.0
    %252 = vmatpush1.msra.mxu0 0.0
    %253 = vmatprep.subr.mxu0 0.0
    %254 = vmatpush1.msra.mxu0 0.0
    %255 = vmatprep.subr.mxu0 0.0
    %256 = vmatpush1.msra.mxu0 0.0
    %257 = vmatprep.subr.mxu0 0.0
    %258 = vmatpush1.msra.mxu0 0.0
    %259 = vmatprep.subr.mxu0 0.0
    %260 = vmatpush1.msra.mxu0 0.0
    %261 = vmatprep.subr.mxu0 0.0
    %262 = vmatpush1.msra.mxu0 0.0
    %263 = vmatprep.subr.mxu0 0.0
    %264 = vmatpush1.msra.mxu0 0.0
    %265 = vmatprep.subr.mxu0 0.0
    %266 = vmatpush1.msra.mxu0 0.0
    %267 = vmatprep.subr.mxu0 0.0
    %268 = vmatpush1.msra.mxu0 0.0
    %269 = vmatprep.subr.mxu0 0.0
    %270 = vmatpush1.msra.mxu0 0.0
    %271 = vmatprep.subr.mxu0 0.0
    %272 = vmatpush1.msra.mxu0 0.0
    %273 = vmatprep.subr.mxu0 0.0
    %274 = vmatpush1.msra.mxu0 0.0
    %275 = vmatprep.subr.mxu0 0.0
    %276 = vmatpush1.msra.mxu0 0.0
    %277 = vmatprep.subr.mxu0 0.0
    %278 = vmatpush1.msra.mxu0 0.0
    %279 = vmatprep.subr.mxu0 0.0
    %280 = vmatpush1.msra.mxu0 0.0
    %281 = vmatprep.subr.mxu0 0.0
    %282 = vmatpush1.msra.mxu0 0.0
    %283 = vmatprep.mubr.f32.mxu0 0.0
    %284 = vmatmul.mubr.f32.gmra.mrb[0].mxu0 %v217
    %v285 = vpop.f32.mrb[0].mxu0
    %v286 = vadd.f32 %v215, %v285
    %v287 = vpop.f32.mrb[0].mxu0
    %288 = vdwg.mxu0
    %s289 = scalar_lea.vmem %s3, 8
    %v290 = vld [vmem:[%s289] sm:$0xff]
    %s291 = scalar_lea.vmem %s7, 32
    %v292 = vld [vmem:[%s291] sm:$0xff]
    %v293 = vld [vmem:[%s291 + $0x8] sm:$0xff]
    %v294 = vld [vmem:[%s291 + $0x10] sm:$0xff]
    %v295 = vld [vmem:[%s291 + $0x18] sm:$0xff]
    %v296 = vld [vmem:[#allocation8 + $0x1] sm:$0x1]
    %v297 = vlaneseq
    %v298 = vshrl.u32 %v297, 7
    %v299 = vsub.s32 0, %v298
    %v300 = vrot.slane %v296, %v299
    %v302 = vsel %vm125, %v290, 0
    %304 = vmatprep.subr.mxu0 0.0
    %305 = vmatpush1.msra.mxu0 %v292
    %306 = vmatprep.subr.mxu0 0.0
    %307 = vmatpush1.msra.mxu0 %v293
    %308 = vmatprep.subr.mxu0 0.0
    %309 = vmatpush1.msra.mxu0 %v294
    %310 = vmatprep.subr.mxu0 0.0
    %311 = vmatpush1.msra.mxu0 %v295
    %312 = vmatprep.subr.mxu0 0.0
    %313 = vmatpush1.msra.mxu0 0.0
    %314 = vmatprep.subr.mxu0 0.0
    %315 = vmatpush1.msra.mxu0 0.0
    %316 = vmatprep.subr.mxu0 0.0
    %317 = vmatpush1.msra.mxu0 0.0
    %318 = vmatprep.subr.mxu0 0.0
    %319 = vmatpush1.msra.mxu0 0.0
    %320 = vmatprep.subr.mxu0 0.0
    %321 = vmatpush1.msra.mxu0 0.0
    %322 = vmatprep.subr.mxu0 0.0
    %323 = vmatpush1.msra.mxu0 0.0
    %324 = vmatprep.subr.mxu0 0.0
    %325 = vmatpush1.msra.mxu0 0.0
    %326 = vmatprep.subr.mxu0 0.0
    %327 = vmatpush1.msra.mxu0 0.0
    %328 = vmatprep.subr.mxu0 0.0
    %329 = vmatpush1.msra.mxu0 0.0
    %330 = vmatprep.subr.mxu0 0.0
    %331 = vmatpush1.msra.mxu0 0.0
    %332 = vmatprep.subr.mxu0 0.0
    %333 = vmatpush1.msra.mxu0 0.0
    %334 = vmatprep.subr.mxu0 0.0
    %335 = vmatpush1.msra.mxu0 0.0
    %336 = vmatprep.subr.mxu0 0.0
    %337 = vmatpush1.msra.mxu0 0.0
    %338 = vmatprep.subr.mxu0 0.0
    %339 = vmatpush1.msra.mxu0 0.0
    %340 = vmatprep.subr.mxu0 0.0
    %341 = vmatpush1.msra.mxu0 0.0
    %342 = vmatprep.subr.mxu0 0.0
    %343 = vmatpush1.msra.mxu0 0.0
    %344 = vmatprep.subr.mxu0 0.0
    %345 = vmatpush1.msra.mxu0 0.0
    %346 = vmatprep.subr.mxu0 0.0
    %347 = vmatpush1.msra.mxu0 0.0
    %348 = vmatprep.subr.mxu0 0.0
    %349 = vmatpush1.msra.mxu0 0.0
    %350 = vmatprep.subr.mxu0 0.0
    %351 = vmatpush1.msra.mxu0 0.0
    %352 = vmatprep.subr.mxu0 0.0
    %353 = vmatpush1.msra.mxu0 0.0
    %354 = vmatprep.subr.mxu0 0.0
    %355 = vmatpush1.msra.mxu0 0.0
    %356 = vmatprep.subr.mxu0 0.0
    %357 = vmatpush1.msra.mxu0 0.0
    %358 = vmatprep.subr.mxu0 0.0
    %359 = vmatpush1.msra.mxu0 0.0
    %360 = vmatprep.subr.mxu0 0.0
    %361 = vmatpush1.msra.mxu0 0.0
    %362 = vmatprep.subr.mxu0 0.0
    %363 = vmatpush1.msra.mxu0 0.0
    %364 = vmatprep.subr.mxu0 0.0
    %365 = vmatpush1.msra.mxu0 0.0
    %366 = vmatprep.subr.mxu0 0.0
    %367 = vmatpush1.msra.mxu0 0.0
    %368 = vmatprep.mubr.f32.mxu0 0.0
    %369 = vmatmul.mubr.f32.gmra.mrb[0].mxu0 %v302
    %v370 = vpop.f32.mrb[0].mxu0
    %v371 = vadd.f32 %v300, %v370
    %v372 = vpop.f32.mrb[0].mxu0
    %373 = vdwg.mxu0
    %s374 = scalar_lea.vmem %s3, 16
    %v375 = vld [vmem:[%s374] sm:$0xff]
    %s376 = scalar_lea.vmem %s7, 64
    %v377 = vld [vmem:[%s376] sm:$0xff]
    %v378 = vld [vmem:[%s376 + $0x8] sm:$0xff]
    %v379 = vld [vmem:[%s376 + $0x10] sm:$0xff]
    %v380 = vld [vmem:[%s376 + $0x18] sm:$0xff]
    %v381 = vld [vmem:[#allocation8 + $0x2] sm:$0x1]
    %v382 = vlaneseq
    %v383 = vshrl.u32 %v382, 7
    %v384 = vsub.s32 0, %v383
    %v385 = vrot.slane %v381, %v384
    %v387 = vsel %vm125, %v375, 0
    %389 = vmatprep.subr.mxu0 0.0
    %390 = vmatpush1.msra.mxu0 %v377
    %391 = vmatprep.subr.mxu0 0.0
    %392 = vmatpush1.msra.mxu0 %v378
    %393 = vmatprep.subr.mxu0 0.0
    %394 = vmatpush1.msra.mxu0 %v379
    %395 = vmatprep.subr.mxu0 0.0
    %396 = vmatpush1.msra.mxu0 %v380
    %397 = vmatprep.subr.mxu0 0.0
    %398 = vmatpush1.msra.mxu0 0.0
    %399 = vmatprep.subr.mxu0 0.0
    %400 = vmatpush1.msra.mxu0 0.0
    %401 = vmatprep.subr.mxu0 0.0
    %402 = vmatpush1.msra.mxu0 0.0
    %403 = vmatprep.subr.mxu0 0.0
    %404 = vmatpush1.msra.mxu0 0.0
    %405 = vmatprep.subr.mxu0 0.0
    %406 = vmatpush1.msra.mxu0 0.0
    %407 = vmatprep.subr.mxu0 0.0
    %408 = vmatpush1.msra.mxu0 0.0
    %409 = vmatprep.subr.mxu0 0.0
    %410 = vmatpush1.msra.mxu0 0.0
    %411 = vmatprep.subr.mxu0 0.0
    %412 = vmatpush1.msra.mxu0 0.0
    %413 = vmatprep.subr.mxu0 0.0
    %414 = vmatpush1.msra.mxu0 0.0
    %415 = vmatprep.subr.mxu0 0.0
    %416 = vmatpush1.msra.mxu0 0.0
    %417 = vmatprep.subr.mxu0 0.0
    %418 = vmatpush1.msra.mxu0 0.0
    %419 = vmatprep.subr.mxu0 0.0
    %420 = vmatpush1.msra.mxu0 0.0
    %421 = vmatprep.subr.mxu0 0.0
    %422 = vmatpush1.msra.mxu0 0.0
    %423 = vmatprep.subr.mxu0 0.0
    %424 = vmatpush1.msra.mxu0 0.0
    %425 = vmatprep.subr.mxu0 0.0
    %426 = vmatpush1.msra.mxu0 0.0
    %427 = vmatprep.subr.mxu0 0.0
    %428 = vmatpush1.msra.mxu0 0.0
    %429 = vmatprep.subr.mxu0 0.0
    %430 = vmatpush1.msra.mxu0 0.0
    %431 = vmatprep.subr.mxu0 0.0
    %432 = vmatpush1.msra.mxu0 0.0
    %433 = vmatprep.subr.mxu0 0.0
    %434 = vmatpush1.msra.mxu0 0.0
    %435 = vmatprep.subr.mxu0 0.0
    %436 = vmatpush1.msra.mxu0 0.0
    %437 = vmatprep.subr.mxu0 0.0
    %438 = vmatpush1.msra.mxu0 0.0
    %439 = vmatprep.subr.mxu0 0.0
    %440 = vmatpush1.msra.mxu0 0.0
    %441 = vmatprep.subr.mxu0 0.0
    %442 = vmatpush1.msra.mxu0 0.0
    %443 = vmatprep.subr.mxu0 0.0
    %444 = vmatpush1.msra.mxu0 0.0
    %445 = vmatprep.subr.mxu0 0.0
    %446 = vmatpush1.msra.mxu0 0.0
    %447 = vmatprep.subr.mxu0 0.0
    %448 = vmatpush1.msra.mxu0 0.0
    %449 = vmatprep.subr.mxu0 0.0
    %450 = vmatpush1.msra.mxu0 0.0
    %451 = vmatprep.subr.mxu0 0.0
    %452 = vmatpush1.msra.mxu0 0.0
    %453 = vmatprep.mubr.f32.mxu0 0.0
    %454 = vmatmul.mubr.f32.gmra.mrb[0].mxu0 %v387
    %v455 = vpop.f32.mrb[0].mxu0
    %v456 = vadd.f32 %v385, %v455
    %v457 = vpop.f32.mrb[0].mxu0
    %458 = vdwg.mxu0
    %s459 = scalar_lea.vmem %s3, 24
    %v460 = vld [vmem:[%s459] sm:$0xff]
    %s461 = scalar_lea.vmem %s7, 96
    %v462 = vld [vmem:[%s461] sm:$0xff]
    %v463 = vld [vmem:[%s461 + $0x8] sm:$0xff]
    %v464 = vld [vmem:[%s461 + $0x10] sm:$0xff]
    %v465 = vld [vmem:[%s461 + $0x18] sm:$0xff]
    %v466 = vld [vmem:[#allocation8 + $0x3] sm:$0x1]
    %v467 = vlaneseq
    %v468 = vshrl.u32 %v467, 7
    %v469 = vsub.s32 0, %v468
    %v470 = vrot.slane %v466, %v469
    %v472 = vsel %vm125, %v460, 0
    %474 = vmatprep.subr.mxu0 0.0
    %475 = vmatpush1.msra.mxu0 %v462
    %476 = vmatprep.subr.mxu0 0.0
    %477 = vmatpush1.msra.mxu0 %v463
    %478 = vmatprep.subr.mxu0 0.0
    %479 = vmatpush1.msra.mxu0 %v464
    %480 = vmatprep.subr.mxu0 0.0
    %481 = vmatpush1.msra.mxu0 %v465
    %482 = vmatprep.subr.mxu0 0.0
    %483 = vmatpush1.msra.mxu0 0.0
    %484 = vmatprep.subr.mxu0 0.0
    %485 = vmatpush1.msra.mxu0 0.0
    %486 = vmatprep.subr.mxu0 0.0
    %487 = vmatpush1.msra.mxu0 0.0
    %488 = vmatprep.subr.mxu0 0.0
    %489 = vmatpush1.msra.mxu0 0.0
    %490 = vmatprep.subr.mxu0 0.0
    %491 = vmatpush1.msra.mxu0 0.0
    %492 = vmatprep.subr.mxu0 0.0
    %493 = vmatpush1.msra.mxu0 0.0
    %494 = vmatprep.subr.mxu0 0.0
    %495 = vmatpush1.msra.mxu0 0.0
    %496 = vmatprep.subr.mxu0 0.0
    %497 = vmatpush1.msra.mxu0 0.0
    %498 = vmatprep.subr.mxu0 0.0
    %499 = vmatpush1.msra.mxu0 0.0
    %500 = vmatprep.subr.mxu0 0.0
    %501 = vmatpush1.msra.mxu0 0.0
    %502 = vmatprep.subr.mxu0 0.0
    %503 = vmatpush1.msra.mxu0 0.0
    %504 = vmatprep.subr.mxu0 0.0
    %505 = vmatpush1.msra.mxu0 0.0
    %506 = vmatprep.subr.mxu0 0.0
    %507 = vmatpush1.msra.mxu0 0.0
    %508 = vmatprep.subr.mxu0 0.0
    %509 = vmatpush1.msra.mxu0 0.0
    %510 = vmatprep.subr.mxu0 0.0
    %511 = vmatpush1.msra.mxu0 0.0
    %512 = vmatprep.subr.mxu0 0.0
    %513 = vmatpush1.msra.mxu0 0.0
    %514 = vmatprep.subr.mxu0 0.0
    %515 = vmatpush1.msra.mxu0 0.0
    %516 = vmatprep.subr.mxu0 0.0
    %517 = vmatpush1.msra.mxu0 0.0
    %518 = vmatprep.subr.mxu0 0.0
    %519 = vmatpush1.msra.mxu0 0.0
    %520 = vmatprep.subr.mxu0 0.0
    %521 = vmatpush1.msra.mxu0 0.0
    %522 = vmatprep.subr.mxu0 0.0
    %523 = vmatpush1.msra.mxu0 0.0
    %524 = vmatprep.subr.mxu0 0.0
    %525 = vmatpush1.msra.mxu0 0.0
    %526 = vmatprep.subr.mxu0 0.0
    %527 = vmatpush1.msra.mxu0 0.0
    %528 = vmatprep.subr.mxu0 0.0
    %529 = vmatpush1.msra.mxu0 0.0
    %530 = vmatprep.subr.mxu0 0.0
    %531 = vmatpush1.msra.mxu0 0.0
    %532 = vmatprep.subr.mxu0 0.0
    %533 = vmatpush1.msra.mxu0 0.0
    %534 = vmatprep.subr.mxu0 0.0
    %535 = vmatpush1.msra.mxu0 0.0
    %536 = vmatprep.subr.mxu0 0.0
    %537 = vmatpush1.msra.mxu0 0.0
    %538 = vmatprep.mubr.f32.mxu0 0.0
    %539 = vmatmul.mubr.f32.gmra.mrb[0].mxu0 %v472
    %v540 = vpop.f32.mrb[0].mxu0
    %v541 = vadd.f32 %v470, %v540
    %v542 = vpop.f32.mrb[0].mxu0
    %543 = vdwg.mxu0
    %v544 = vld [vmem:[%s9] sm:$0xff]
    %v545 = vld [vmem:[%s9 + $0x8] sm:$0xff]
    %v546 = vld [vmem:[%s9 + $0x10] sm:$0xff]
    %v547 = vld [vmem:[%s9 + $0x18] sm:$0xff]
    %v548 = vld [vmem:[%s9 + $0x20] sm:$0xff]
    %v549 = vld [vmem:[%s9 + $0x28] sm:$0xff]
    %v550 = vld [vmem:[%s11] sm:$0x1]
    %v552 = vlaneseq
    %v553 = vshrl.u32 %v552, 7
    %v554 = vsub.s32 0, %v553
    %v555 = vrot.slane %v550, %v554
    %vm557 = vcmask 392192
    %v559 = vsel %vm557, %v205, 0
    %561 = vmatprep.subr.mxu0 0.0
    %562 = vmatpush1.msra.mxu0 %v544
    %563 = vmatprep.subr.mxu0 0.0
    %564 = vmatpush1.msra.mxu0 %v545
    %565 = vmatprep.subr.mxu0 0.0
    %566 = vmatpush1.msra.mxu0 %v546
    %567 = vmatprep.subr.mxu0 0.0
    %568 = vmatpush1.msra.mxu0 %v547
    %569 = vmatprep.subr.mxu0 0.0
    %570 = vmatpush1.msra.mxu0 %v548
    %571 = vmatprep.subr.mxu0 0.0
    %572 = vmatpush1.msra.mxu0 %v549
    %573 = vmatprep.subr.mxu0 0.0
    %574 = vmatpush1.msra.mxu0 0.0
    %575 = vmatprep.subr.mxu0 0.0
    %576 = vmatpush1.msra.mxu0 0.0
    %577 = vmatprep.subr.mxu0 0.0
    %578 = vmatpush1.msra.mxu0 0.0
    %579 = vmatprep.subr.mxu0 0.0
    %580 = vmatpush1.msra.mxu0 0.0
    %581 = vmatprep.subr.mxu0 0.0
    %582 = vmatpush1.msra.mxu0 0.0
    %583 = vmatprep.subr.mxu0 0.0
    %584 = vmatpush1.msra.mxu0 0.0
    %585 = vmatprep.subr.mxu0 0.0
    %586 = vmatpush1.msra.mxu0 0.0
    %587 = vmatprep.subr.mxu0 0.0
    %588 = vmatpush1.msra.mxu0 0.0
    %589 = vmatprep.subr.mxu0 0.0
    %590 = vmatpush1.msra.mxu0 0.0
    %591 = vmatprep.subr.mxu0 0.0
    %592 = vmatpush1.msra.mxu0 0.0
    %593 = vmatprep.subr.mxu0 0.0
    %594 = vmatpush1.msra.mxu0 0.0
    %595 = vmatprep.subr.mxu0 0.0
    %596 = vmatpush1.msra.mxu0 0.0
    %597 = vmatprep.subr.mxu0 0.0
    %598 = vmatpush1.msra.mxu0 0.0
    %599 = vmatprep.subr.mxu0 0.0
    %600 = vmatpush1.msra.mxu0 0.0
    %601 = vmatprep.subr.mxu0 0.0
    %602 = vmatpush1.msra.mxu0 0.0
    %603 = vmatprep.subr.mxu0 0.0
    %604 = vmatpush1.msra.mxu0 0.0
    %605 = vmatprep.subr.mxu0 0.0
    %606 = vmatpush1.msra.mxu0 0.0
    %607 = vmatprep.subr.mxu0 0.0
    %608 = vmatpush1.msra.mxu0 0.0
    %609 = vmatprep.subr.mxu0 0.0
    %610 = vmatpush1.msra.mxu0 0.0
    %611 = vmatprep.subr.mxu0 0.0
    %612 = vmatpush1.msra.mxu0 0.0
    %613 = vmatprep.subr.mxu0 0.0
    %614 = vmatpush1.msra.mxu0 0.0
    %615 = vmatprep.subr.mxu0 0.0
    %616 = vmatpush1.msra.mxu0 0.0
    %617 = vmatprep.subr.mxu0 0.0
    %618 = vmatpush1.msra.mxu0 0.0
    %619 = vmatprep.subr.mxu0 0.0
    %620 = vmatpush1.msra.mxu0 0.0
    %621 = vmatprep.subr.mxu0 0.0
    %622 = vmatpush1.msra.mxu0 0.0
    %623 = vmatprep.subr.mxu0 0.0
    %624 = vmatpush1.msra.mxu0 0.0
    %625 = vmatprep.mubr.f32.mxu0 0.0
    %626 = vmatmul.mubr.f32.gmra.mrb[0].mxu0 %v559
    %v627 = vpop.f32.mrb[0].mxu0
    %v628 = vadd.f32 %v555, %v627
    %v629 = vpop.f32.mrb[0].mxu0
    %630 = vdwg.mxu0
    %v631 = vld [vmem:[#allocation5] sm:$0xff]
    %v632 = vld [vmem:[#allocation5 + $0x8] sm:$0xff]
    %v633 = vld [vmem:[#allocation5 + $0x10] sm:$0xff]
    %v634 = vld [vmem:[#allocation5 + $0x18] sm:$0xff]
    %v635 = vld [vmem:[#allocation5 + $0x20] sm:$0xff]
    %v636 = vld [vmem:[#allocation5 + $0x28] sm:$0xff]
    %637 = vmatprep.subr.mxu0 0.0
    %638 = vmatpush1.msra.mxu0 %v631
    %639 = vmatprep.subr.mxu0 0.0
    %640 = vmatpush1.msra.mxu0 %v632
    %641 = vmatprep.subr.mxu0 0.0
    %642 = vmatpush1.msra.mxu0 %v633
    %643 = vmatprep.subr.mxu0 0.0
    %644 = vmatpush1.msra.mxu0 %v634
    %645 = vmatprep.subr.mxu0 0.0
    %646 = vmatpush1.msra.mxu0 %v635
    %647 = vmatprep.subr.mxu0 0.0
    %648 = vmatpush1.msra.mxu0 %v636
    %649 = vmatprep.subr.mxu0 0.0
    %650 = vmatpush1.msra.mxu0 0.0
    %651 = vmatprep.subr.mxu0 0.0
    %652 = vmatpush1.msra.mxu0 0.0
    %653 = vmatprep.subr.mxu0 0.0
    %654 = vmatpush1.msra.mxu0 0.0
    %655 = vmatprep.subr.mxu0 0.0
    %656 = vmatpush1.msra.mxu0 0.0
    %657 = vmatprep.subr.mxu0 0.0
    %658 = vmatpush1.msra.mxu0 0.0
    %659 = vmatprep.subr.mxu0 0.0
    %660 = vmatpush1.msra.mxu0 0.0
    %661 = vmatprep.subr.mxu0 0.0
    %662 = vmatpush1.msra.mxu0 0.0
    %663 = vmatprep.subr.mxu0 0.0
    %664 = vmatpush1.msra.mxu0 0.0
    %665 = vmatprep.subr.mxu0 0.0
    %666 = vmatpush1.msra.mxu0 0.0
    %667 = vmatprep.subr.mxu0 0.0
    %668 = vmatpush1.msra.mxu0 0.0
    %669 = vmatprep.subr.mxu0 0.0
    %670 = vmatpush1.msra.mxu0 0.0
    %671 = vmatprep.subr.mxu0 0.0
    %672 = vmatpush1.msra.mxu0 0.0
    %673 = vmatprep.subr.mxu0 0.0
    %674 = vmatpush1.msra.mxu0 0.0
    %675 = vmatprep.subr.mxu0 0.0
    %676 = vmatpush1.msra.mxu0 0.0
    %677 = vmatprep.subr.mxu0 0.0
    %678 = vmatpush1.msra.mxu0 0.0
    %679 = vmatprep.subr.mxu0 0.0
    %680 = vmatpush1.msra.mxu0 0.0
    %681 = vmatprep.subr.mxu0 0.0
    %682 = vmatpush1.msra.mxu0 0.0
    %683 = vmatprep.subr.mxu0 0.0
    %684 = vmatpush1.msra.mxu0 0.0
    %685 = vmatprep.subr.mxu0 0.0
    %686 = vmatpush1.msra.mxu0 0.0
    %687 = vmatprep.subr.mxu0 0.0
    %688 = vmatpush1.msra.mxu0 0.0
    %689 = vmatprep.subr.mxu0 0.0
    %690 = vmatpush1.msra.mxu0 0.0
    %691 = vmatprep.subr.mxu0 0.0
    %692 = vmatpush1.msra.mxu0 0.0
    %693 = vmatprep.subr.mxu0 0.0
    %694 = vmatpush1.msra.mxu0 0.0
    %695 = vmatprep.subr.mxu0 0.0
    %696 = vmatpush1.msra.mxu0 0.0
    %697 = vmatprep.subr.mxu0 0.0
    %698 = vmatpush1.msra.mxu0 0.0
    %699 = vmatprep.subr.mxu0 0.0
    %700 = vmatpush1.msra.mxu0 0.0
    %701 = vmatprep.mubr.f32.mxu0 0.0
    %702 = vmatmul.mubr.f32.gmra.mrb[0].mxu0 %v559
    %v703 = vpop.f32.mrb[0].mxu0
    %v704 = vadd.f32 %v286, %v703
    %v705 = vpop.f32.mrb[0].mxu0
    %706 = vdwg.mxu0
    %v707 = vtanh.pop %v704
    %v708 = vmul.f32 %v707, 0.5
    %v709 = vadd.f32 %v708, 0.5
    %v710 = vld [vmem:[#allocation2] sm:$0xff]
    %712 = vrot.lane.b32.xlu0 %v710, 32
    %v713 = vpop.permute.xlu0 %712
    %v715 = vmul.f32 %v709, %v713
    %717 = vrot.lane.b32.xlu0 %v707, 64
    %v718 = vpop.permute.xlu0 %717
    %v720 = vmul.f32 %v709, %v718
    %722 = vrot.lane.b32.xlu0 %v720, 32
    %v723 = vpop.permute.xlu0 %722
    %v725 = vadd.f32 %v715, %v723
    %v726 = vtanh.pop %v725
    %728 = vrot.lane.b32.xlu0 %v726, 64
    %v729 = vpop.permute.xlu0 %728
    %v731 = vmul.f32 %v709, %v729
    %733 = vrot.lane.b32.xlu0 %v731, 32
    %v734 = vpop.permute.xlu0 %733
    %736 = vst.msk [vmem:[#allocation12] sm:$0xff] %vm125, %v734
    %738 = vrot.lane.b32.xlu0 %v725, 96
    %v739 = vpop.permute.xlu0 %738
    %741 = vst.msk [vmem:[#allocation14] sm:$0xff] %vm125, %v739
    %v742 = vld [vmem:[#allocation7] sm:$0xff]
    %v743 = vld [vmem:[#allocation7 + $0x8] sm:$0xff]
    %v744 = vld [vmem:[#allocation7 + $0x10] sm:$0xff]
    %v745 = vld [vmem:[#allocation7 + $0x18] sm:$0xff]
    %v746 = vsel %vm125, %v734, 0
    %748 = vmatprep.subr.mxu0 0.0
    %749 = vmatpush1.msra.mxu0 %v742
    %750 = vmatprep.subr.mxu0 0.0
    %751 = vmatpush1.msra.mxu0 %v743
    %752 = vmatprep.subr.mxu0 0.0
    %753 = vmatpush1.msra.mxu0 %v744
    %754 = vmatprep.subr.mxu0 0.0
    %755 = vmatpush1.msra.mxu0 %v745
    %756 = vmatprep.subr.mxu0 0.0
    %757 = vmatpush1.msra.mxu0 0.0
    %758 = vmatprep.subr.mxu0 0.0
    %759 = vmatpush1.msra.mxu0 0.0
    %760 = vmatprep.subr.mxu0 0.0
    %761 = vmatpush1.msra.mxu0 0.0
    %762 = vmatprep.subr.mxu0 0.0
    %763 = vmatpush1.msra.mxu0 0.0
    %764 = vmatprep.subr.mxu0 0.0
    %765 = vmatpush1.msra.mxu0 0.0
    %766 = vmatprep.subr.mxu0 0.0
    %767 = vmatpush1.msra.mxu0 0.0
    %768 = vmatprep.subr.mxu0 0.0
    %769 = vmatpush1.msra.mxu0 0.0
    %770 = vmatprep.subr.mxu0 0.0
    %771 = vmatpush1.msra.mxu0 0.0
    %772 = vmatprep.subr.mxu0 0.0
    %773 = vmatpush1.msra.mxu0 0.0
    %774 = vmatprep.subr.mxu0 0.0
    %775 = vmatpush1.msra.mxu0 0.0
    %776 = vmatprep.subr.mxu0 0.0
    %777 = vmatpush1.msra.mxu0 0.0
    %778 = vmatprep.subr.mxu0 0.0
    %779 = vmatpush1.msra.mxu0 0.0
    %780 = vmatprep.subr.mxu0 0.0
    %781 = vmatpush1.msra.mxu0 0.0
    %782 = vmatprep.subr.mxu0 0.0
    %783 = vmatpush1.msra.mxu0 0.0
    %784 = vmatprep.subr.mxu0 0.0
    %785 = vmatpush1.msra.mxu0 0.0
    %786 = vmatprep.subr.mxu0 0.0
    %787 = vmatpush1.msra.mxu0 0.0
    %788 = vmatprep.subr.mxu0 0.0
    %789 = vmatpush1.msra.mxu0 0.0
    %790 = vmatprep.subr.mxu0 0.0
    %791 = vmatpush1.msra.mxu0 0.0
    %792 = vmatprep.subr.mxu0 0.0
    %793 = vmatpush1.msra.mxu0 0.0
    %794 = vmatprep.subr.mxu0 0.0
    %795 = vmatpush1.msra.mxu0 0.0
    %796 = vmatprep.subr.mxu0 0.0
    %797 = vmatpush1.msra.mxu0 0.0
    %798 = vmatprep.subr.mxu0 0.0
    %799 = vmatpush1.msra.mxu0 0.0
    %800 = vmatprep.subr.mxu0 0.0
    %801 = vmatpush1.msra.mxu0 0.0
    %802 = vmatprep.subr.mxu0 0.0
    %803 = vmatpush1.msra.mxu0 0.0
    %804 = vmatprep.subr.mxu0 0.0
    %805 = vmatpush1.msra.mxu0 0.0
    %806 = vmatprep.subr.mxu0 0.0
    %807 = vmatpush1.msra.mxu0 0.0
    %808 = vmatprep.subr.mxu0 0.0
    %809 = vmatpush1.msra.mxu0 0.0
    %810 = vmatprep.subr.mxu0 0.0
    %811 = vmatpush1.msra.mxu0 0.0
    %812 = vmatprep.mubr.f32.mxu0 0.0
    %813 = vmatmul.mubr.f32.gmra.mrb[0].mxu0 %v746
    %v814 = vpop.f32.mrb[0].mxu0
    %v815 = vadd.f32 %v371, %v814
    %v816 = vpop.f32.mrb[0].mxu0
    %817 = vdwg.mxu0
    %v818 = vtanh.pop %v815
    %v819 = vmul.f32 %v818, 0.5
    %v820 = vadd.f32 %v819, 0.5
    %s821 = scalar_lea.vmem [#allocation2], 8
    %v822 = vld [vmem:[%s821] sm:$0xff]
    %824 = vrot.lane.b32.xlu0 %v822, 32
    %v825 = vpop.permute.xlu0 %824
    %v827 = vmul.f32 %v820, %v825
    %829 = vrot.lane.b32.xlu0 %v818, 64
    %v830 = vpop.permute.xlu0 %829
    %v832 = vmul.f32 %v820, %v830
    %834 = vrot.lane.b32.xlu0 %v832, 32
    %v835 = vpop.permute.xlu0 %834
    %v837 = vadd.f32 %v827, %v835
    %v838 = vtanh.pop %v837
    %840 = vrot.lane.b32.xlu0 %v838, 64
    %v841 = vpop.permute.xlu0 %840
    %v843 = vmul.f32 %v820, %v841
    %845 = vrot.lane.b32.xlu0 %v843, 32
    %v846 = vpop.permute.xlu0 %845
    %s848 = scalar_lea.vmem [#allocation12], 8
    %849 = vst.msk [vmem:[%s848] sm:$0xff] %vm125, %v846
    %851 = vrot.lane.b32.xlu0 %v837, 96
    %v852 = vpop.permute.xlu0 %851
    %s854 = scalar_lea.vmem [#allocation14], 8
    %855 = vst.msk [vmem:[%s854] sm:$0xff] %vm125, %v852
    %s856 = scalar_lea.vmem [#allocation7], 32
    %v857 = vld [vmem:[%s856] sm:$0xff]
    %v858 = vld [vmem:[%s856 + $0x8] sm:$0xff]
    %v859 = vld [vmem:[%s856 + $0x10] sm:$0xff]
    %v860 = vld [vmem:[%s856 + $0x18] sm:$0xff]
    %v861 = vsel %vm125, %v846, 0
    %863 = vmatprep.subr.mxu0 0.0
    %864 = vmatpush1.msra.mxu0 %v857
    %865 = vmatprep.subr.mxu0 0.0
    %866 = vmatpush1.msra.mxu0 %v858
    %867 = vmatprep.subr.mxu0 0.0
    %868 = vmatpush1.msra.mxu0 %v859
    %869 = vmatprep.subr.mxu0 0.0
    %870 = vmatpush1.msra.mxu0 %v860
    %871 = vmatprep.subr.mxu0 0.0
    %872 = vmatpush1.msra.mxu0 0.0
    %873 = vmatprep.subr.mxu0 0.0
    %874 = vmatpush1.msra.mxu0 0.0
    %875 = vmatprep.subr.mxu0 0.0
    %876 = vmatpush1.msra.mxu0 0.0
    %877 = vmatprep.subr.mxu0 0.0
    %878 = vmatpush1.msra.mxu0 0.0
    %879 = vmatprep.subr.mxu0 0.0
    %880 = vmatpush1.msra.mxu0 0.0
    %881 = vmatprep.subr.mxu0 0.0
    %882 = vmatpush1.msra.mxu0 0.0
    %883 = vmatprep.subr.mxu0 0.0
    %884 = vmatpush1.msra.mxu0 0.0
    %885 = vmatprep.subr.mxu0 0.0
    %886 = vmatpush1.msra.mxu0 0.0
    %887 = vmatprep.subr.mxu0 0.0
    %888 = vmatpush1.msra.mxu0 0.0
    %889 = vmatprep.subr.mxu0 0.0
    %890 = vmatpush1.msra.mxu0 0.0
    %891 = vmatprep.subr.mxu0 0.0
    %892 = vmatpush1.msra.mxu0 0.0
    %893 = vmatprep.subr.mxu0 0.0
    %894 = vmatpush1.msra.mxu0 0.0
    %895 = vmatprep.subr.mxu0 0.0
    %896 = vmatpush1.msra.mxu0 0.0
    %897 = vmatprep.subr.mxu0 0.0
    %898 = vmatpush1.msra.mxu0 0.0
    %899 = vmatprep.subr.mxu0 0.0
    %900 = vmatpush1.msra.mxu0 0.0
    %901 = vmatprep.subr.mxu0 0.0
    %902 = vmatpush1.msra.mxu0 0.0
    %903 = vmatprep.subr.mxu0 0.0
    %904 = vmatpush1.msra.mxu0 0.0
    %905 = vmatprep.subr.mxu0 0.0
    %906 = vmatpush1.msra.mxu0 0.0
    %907 = vmatprep.subr.mxu0 0.0
    %908 = vmatpush1.msra.mxu0 0.0
    %909 = vmatprep.subr.mxu0 0.0
    %910 = vmatpush1.msra.mxu0 0.0
    %911 = vmatprep.subr.mxu0 0.0
    %912 = vmatpush1.msra.mxu0 0.0
    %913 = vmatprep.subr.mxu0 0.0
    %914 = vmatpush1.msra.mxu0 0.0
    %915 = vmatprep.subr.mxu0 0.0
    %916 = vmatpush1.msra.mxu0 0.0
    %917 = vmatprep.subr.mxu0 0.0
    %918 = vmatpush1.msra.mxu0 0.0
    %919 = vmatprep.subr.mxu0 0.0
    %920 = vmatpush1.msra.mxu0 0.0
    %921 = vmatprep.subr.mxu0 0.0
    %922 = vmatpush1.msra.mxu0 0.0
    %923 = vmatprep.subr.mxu0 0.0
    %924 = vmatpush1.msra.mxu0 0.0
    %925 = vmatprep.subr.mxu0 0.0
    %926 = vmatpush1.msra.mxu0 0.0
    %927 = vmatprep.mubr.f32.mxu0 0.0
    %928 = vmatmul.mubr.f32.gmra.mrb[0].mxu0 %v861
    %v929 = vpop.f32.mrb[0].mxu0
    %v930 = vadd.f32 %v456, %v929
    %v931 = vpop.f32.mrb[0].mxu0
    %932 = vdwg.mxu0
    %v933 = vtanh.pop %v930
    %v934 = vmul.f32 %v933, 0.5
    %v935 = vadd.f32 %v934, 0.5
    %s936 = scalar_lea.vmem [#allocation2], 16
    %v937 = vld [vmem:[%s936] sm:$0xff]
    %939 = vrot.lane.b32.xlu0 %v937, 32
    %v940 = vpop.permute.xlu0 %939
    %v942 = vmul.f32 %v935, %v940
    %944 = vrot.lane.b32.xlu0 %v933, 64
    %v945 = vpop.permute.xlu0 %944
    %v947 = vmul.f32 %v935, %v945
    %949 = vrot.lane.b32.xlu0 %v947, 32
    %v950 = vpop.permute.xlu0 %949
    %v952 = vadd.f32 %v942, %v950
    %v953 = vtanh.pop %v952
    %955 = vrot.lane.b32.xlu0 %v953, 64
    %v956 = vpop.permute.xlu0 %955
    %v958 = vmul.f32 %v935, %v956
    %960 = vrot.lane.b32.xlu0 %v958, 32
    %v961 = vpop.permute.xlu0 %960
    %s963 = scalar_lea.vmem [#allocation12], 16
    %964 = vst.msk [vmem:[%s963] sm:$0xff] %vm125, %v961
    %966 = vrot.lane.b32.xlu0 %v952, 96
    %v967 = vpop.permute.xlu0 %966
    %s969 = scalar_lea.vmem [#allocation14], 16
    %970 = vst.msk [vmem:[%s969] sm:$0xff] %vm125, %v967
    %s971 = scalar_lea.vmem [#allocation7], 64
    %v972 = vld [vmem:[%s971] sm:$0xff]
    %v973 = vld [vmem:[%s971 + $0x8] sm:$0xff]
    %v974 = vld [vmem:[%s971 + $0x10] sm:$0xff]
    %v975 = vld [vmem:[%s971 + $0x18] sm:$0xff]
    %v976 = vsel %vm125, %v961, 0
    %978 = vmatprep.subr.mxu0 0.0
    %979 = vmatpush1.msra.mxu0 %v972
    %980 = vmatprep.subr.mxu0 0.0
    %981 = vmatpush1.msra.mxu0 %v973
    %982 = vmatprep.subr.mxu0 0.0
    %983 = vmatpush1.msra.mxu0 %v974
    %984 = vmatprep.subr.mxu0 0.0
    %985 = vmatpush1.msra.mxu0 %v975
    %986 = vmatprep.subr.mxu0 0.0
    %987 = vmatpush1.msra.mxu0 0.0
    %988 = vmatprep.subr.mxu0 0.0
    %989 = vmatpush1.msra.mxu0 0.0
    %990 = vmatprep.subr.mxu0 0.0
    %991 = vmatpush1.msra.mxu0 0.0
    %992 = vmatprep.subr.mxu0 0.0
    %993 = vmatpush1.msra.mxu0 0.0
    %994 = vmatprep.subr.mxu0 0.0
    %995 = vmatpush1.msra.mxu0 0.0
    %996 = vmatprep.subr.mxu0 0.0
    %997 = vmatpush1.msra.mxu0 0.0
    %998 = vmatprep.subr.mxu0 0.0
    %999 = vmatpush1.msra.mxu0 0.0
    %1000 = vmatprep.subr.mxu0 0.0
    %1001 = vmatpush1.msra.mxu0 0.0
    %1002 = vmatprep.subr.mxu0 0.0
    %1003 = vmatpush1.msra.mxu0 0.0
    %1004 = vmatprep.subr.mxu0 0.0
    %1005 = vmatpush1.msra.mxu0 0.0
    %1006 = vmatprep.subr.mxu0 0.0
    %1007 = vmatpush1.msra.mxu0 0.0
    %1008 = vmatprep.subr.mxu0 0.0
    %1009 = vmatpush1.msra.mxu0 0.0
    %1010 = vmatprep.subr.mxu0 0.0
    %1011 = vmatpush1.msra.mxu0 0.0
    %1012 = vmatprep.subr.mxu0 0.0
    %1013 = vmatpush1.msra.mxu0 0.0
    %1014 = vmatprep.subr.mxu0 0.0
    %1015 = vmatpush1.msra.mxu0 0.0
    %1016 = vmatprep.subr.mxu0 0.0
    %1017 = vmatpush1.msra.mxu0 0.0
    %1018 = vmatprep.subr.mxu0 0.0
    %1019 = vmatpush1.msra.mxu0 0.0
    %1020 = vmatprep.subr.mxu0 0.0
    %1021 = vmatpush1.msra.mxu0 0.0
    %1022 = vmatprep.subr.mxu0 0.0
    %1023 = vmatpush1.msra.mxu0 0.0
    %1024 = vmatprep.subr.mxu0 0.0
    %1025 = vmatpush1.msra.mxu0 0.0
    %1026 = vmatprep.subr.mxu0 0.0
    %1027 = vmatpush1.msra.mxu0 0.0
    %1028 = vmatprep.subr.mxu0 0.0
    %1029 = vmatpush1.msra.mxu0 0.0
    %1030 = vmatprep.subr.mxu0 0.0
    %1031 = vmatpush1.msra.mxu0 0.0
    %1032 = vmatprep.subr.mxu0 0.0
    %1033 = vmatpush1.msra.mxu0 0.0
    %1034 = vmatprep.subr.mxu0 0.0
    %1035 = vmatpush1.msra.mxu0 0.0
    %1036 = vmatprep.subr.mxu0 0.0
    %1037 = vmatpush1.msra.mxu0 0.0
    %1038 = vmatprep.subr.mxu0 0.0
    %1039 = vmatpush1.msra.mxu0 0.0
    %1040 = vmatprep.subr.mxu0 0.0
    %1041 = vmatpush1.msra.mxu0 0.0
    %1042 = vmatprep.mubr.f32.mxu0 0.0
    %1043 = vmatmul.mubr.f32.gmra.mrb[0].mxu0 %v976
    %v1044 = vpop.f32.mrb[0].mxu0
    %v1045 = vadd.f32 %v541, %v1044
    %v1046 = vpop.f32.mrb[0].mxu0
    %1047 = vdwg.mxu0
    %v1048 = vtanh.pop %v1045
    %v1049 = vmul.f32 %v1048, 0.5
    %v1050 = vadd.f32 %v1049, 0.5
    %s1051 = scalar_lea.vmem [#allocation2], 24
    %v1052 = vld [vmem:[%s1051] sm:$0xff]
    %1054 = vrot.lane.b32.xlu0 %v1052, 32
    %v1055 = vpop.permute.xlu0 %1054
    %v1057 = vmul.f32 %v1050, %v1055
    %1059 = vrot.lane.b32.xlu0 %v1048, 64
    %v1060 = vpop.permute.xlu0 %1059
    %v1062 = vmul.f32 %v1050, %v1060
    %1064 = vrot.lane.b32.xlu0 %v1062, 32
    %v1065 = vpop.permute.xlu0 %1064
    %v1067 = vadd.f32 %v1057, %v1065
    %v1068 = vtanh.pop %v1067
    %1070 = vrot.lane.b32.xlu0 %v1068, 64
    %v1071 = vpop.permute.xlu0 %1070
    %v1073 = vmul.f32 %v1050, %v1071
    %1075 = vrot.lane.b32.xlu0 %v1073, 32
    %v1076 = vpop.permute.xlu0 %1075
    %s1078 = scalar_lea.vmem [#allocation12], 24
    %1079 = vst.msk [vmem:[%s1078] sm:$0xff] %vm125, %v1076
    %1081 = vrot.lane.b32.xlu0 %v1067, 96
    %v1082 = vpop.permute.xlu0 %1081
    %s1084 = scalar_lea.vmem [#allocation14], 24
    %1085 = vst.msk [vmem:[%s1084] sm:$0xff] %vm125, %v1082
    %v1086 = vld [vmem:[#allocation10] sm:$0xff]
    %v1087 = vld [vmem:[#allocation10 + $0x8] sm:$0xff]
    %v1088 = vld [vmem:[#allocation10 + $0x10] sm:$0xff]
    %v1089 = vld [vmem:[#allocation10 + $0x18] sm:$0xff]
    %v1090 = vsel %vm125, %v1076, 0
    %1092 = vmatprep.subr.mxu0 0.0
    %1093 = vmatpush1.msra.mxu0 %v1086
    %1094 = vmatprep.subr.mxu0 0.0
    %1095 = vmatpush1.msra.mxu0 %v1087
    %1096 = vmatprep.subr.mxu0 0.0
    %1097 = vmatpush1.msra.mxu0 %v1088
    %1098 = vmatprep.subr.mxu0 0.0
    %1099 = vmatpush1.msra.mxu0 %v1089
    %1100 = vmatprep.subr.mxu0 0.0
    %1101 = vmatpush1.msra.mxu0 0.0
    %1102 = vmatprep.subr.mxu0 0.0
    %1103 = vmatpush1.msra.mxu0 0.0
    %1104 = vmatprep.subr.mxu0 0.0
    %1105 = vmatpush1.msra.mxu0 0.0
    %1106 = vmatprep.subr.mxu0 0.0
    %1107 = vmatpush1.msra.mxu0 0.0
    %1108 = vmatprep.subr.mxu0 0.0
    %1109 = vmatpush1.msra.mxu0 0.0
    %1110 = vmatprep.subr.mxu0 0.0
    %1111 = vmatpush1.msra.mxu0 0.0
    %1112 = vmatprep.subr.mxu0 0.0
    %1113 = vmatpush1.msra.mxu0 0.0
    %1114 = vmatprep.subr.mxu0 0.0
    %1115 = vmatpush1.msra.mxu0 0.0
    %1116 = vmatprep.subr.mxu0 0.0
    %1117 = vmatpush1.msra.mxu0 0.0
    %1118 = vmatprep.subr.mxu0 0.0
    %1119 = vmatpush1.msra.mxu0 0.0
    %1120 = vmatprep.subr.mxu0 0.0
    %1121 = vmatpush1.msra.mxu0 0.0
    %1122 = vmatprep.subr.mxu0 0.0
    %1123 = vmatpush1.msra.mxu0 0.0
    %1124 = vmatprep.subr.mxu0 0.0
    %1125 = vmatpush1.msra.mxu0 0.0
    %1126 = vmatprep.subr.mxu0 0.0
    %1127 = vmatpush1.msra.mxu0 0.0
    %1128 = vmatprep.subr.mxu0 0.0
    %1129 = vmatpush1.msra.mxu0 0.0
    %1130 = vmatprep.subr.mxu0 0.0
    %1131 = vmatpush1.msra.mxu0 0.0
    %1132 = vmatprep.subr.mxu0 0.0
    %1133 = vmatpush1.msra.mxu0 0.0
    %1134 = vmatprep.subr.mxu0 0.0
    %1135 = vmatpush1.msra.mxu0 0.0
    %1136 = vmatprep.subr.mxu0 0.0
    %1137 = vmatpush1.msra.mxu0 0.0
    %1138 = vmatprep.subr.mxu0 0.0
    %1139 = vmatpush1.msra.mxu0 0.0
    %1140 = vmatprep.subr.mxu0 0.0
    %1141 = vmatpush1.msra.mxu0 0.0
    %1142 = vmatprep.subr.mxu0 0.0
    %1143 = vmatpush1.msra.mxu0 0.0
    %1144 = vmatprep.subr.mxu0 0.0
    %1145 = vmatpush1.msra.mxu0 0.0
    %1146 = vmatprep.subr.mxu0 0.0
    %1147 = vmatpush1.msra.mxu0 0.0
    %1148 = vmatprep.subr.mxu0 0.0
    %1149 = vmatpush1.msra.mxu0 0.0
    %1150 = vmatprep.subr.mxu0 0.0
    %1151 = vmatpush1.msra.mxu0 0.0
    %1152 = vmatprep.subr.mxu0 0.0
    %1153 = vmatpush1.msra.mxu0 0.0
    %1154 = vmatprep.subr.mxu0 0.0
    %1155 = vmatpush1.msra.mxu0 0.0
    %1156 = vmatprep.mubr.f32.mxu0 0.0
    %1157 = vmatmul.mubr.f32.gmra.mrb[0].mxu0 %v1090
    %v1158 = vpop.f32.mrb[0].mxu0
    %v1159 = vadd.f32 0.0, %v1158
    %v1160 = vpop.f32.mrb[0].mxu0
    %1161 = vdwg.mxu0
    %v1162 = vadd.f32 %v628, %v1159
    %1163 = vst.msk [vmem:[#allocation11] sm:$0xff] %vm125, %v1162
    // Predicated region
    $region70: #{decoder_forward.1} parent=1 // pred_check
      _
    $region71: #{decoder_forward.1} parent=1 // pred_check_branch
      %1165 = sbr.rel (0) target = $region73
    $region72: #{decoder_forward.1} parent=1 // pred_region
      %s1167 = ssub.s32 128, 128
      %1168 = vsyncadd [#allocation4], %s1167
      %s1170 = sshll.u32 [#allocation11], 4
      %s1171 = int_to_ptr.vmem [resolvable:$true] %s1170
      %1173 = dma.vmem_to_hbm [thread:$0]  %s1171, 128, %s12, [#allocation4]
    $region73: #{decoder_forward.1} parent=1 // pred_fallthru
      _
    // Predicated region
    $region74: #{decoder_forward.1} parent=1 // pred_check
      _
    $region75: #{decoder_forward.1} parent=1 // pred_check_branch
      %1175 = sbr.rel (0) target = $region77
    $region76: #{decoder_forward.1} parent=1 // pred_region
      %s1177 = ssub.s32 512, 512
      %1178 = vsyncadd [#allocation13], %s1177
      %s1179 = sshll.u32 [#allocation12], 4
      %s1180 = int_to_ptr.vmem [resolvable:$true] %s1179
      %1185 = dma.vmem_to_hbm [thread:$0]  %s1180, 512, %s13, [#allocation13], 128, 128, 8
    $region77: #{decoder_forward.1} parent=1 // pred_fallthru
      _
    // Predicated region
    $region78: #{decoder_forward.1} parent=1 // pred_check
      _
    $region79: #{decoder_forward.1} parent=1 // pred_check_branch
      %1187 = sbr.rel (0) target = $region81
    $region80: #{decoder_forward.1} parent=1 // pred_region
      %s1189 = ssub.s32 512, 512
      %1190 = vsyncadd [#allocation13], %s1189
      %s1191 = sshll.u32 [#allocation14], 4
      %s1192 = int_to_ptr.vmem [resolvable:$true] %s1191
      %1197 = dma.vmem_to_hbm [thread:$0]  %s1192, 512, %s14, [#allocation13], 128, 128, 8
    $region81: #{decoder_forward.1} parent=1 // pred_fallthru
      _
    // Predicated region
    $region82: #{decoder_forward.1} parent=1 // pred_check
      _
    $region83: #{decoder_forward.1} parent=1 // pred_check_branch
      %1199 = sbr.rel (0) target = $region85
    $region84: #{decoder_forward.1} parent=1 // pred_region
      %1200 = dma.done [#allocation4], 128
    $region85: #{decoder_forward.1} parent=1 // pred_fallthru
      _
    // Predicated region
    $region86: #{decoder_forward.1} parent=1 // pred_check
      _
    $region87: #{decoder_forward.1} parent=1 // pred_check_branch
      %1202 = sbr.rel (0) target = $region89
    $region88: #{decoder_forward.1} parent=1 // pred_region
      %1203 = dma.done [#allocation13], 512
    $region89: #{decoder_forward.1} parent=1 // pred_fallthru
      _
    // Predicated region
    $region90: #{decoder_forward.1} parent=1 // pred_check
      _
    $region91: #{decoder_forward.1} parent=1 // pred_check_branch
      %1205 = sbr.rel (0) target = $region93
    $region92: #{decoder_forward.1} parent=1 // pred_region
      %1206 = dma.done [#allocation13], 512
    $region93: #{decoder_forward.1} parent=1 // pred_fallthru
      _
    %1207 = vsyncpa [#allocation3], 1
    %1208 = vsyncpa [#allocation6], 1
    %1209 = vsyncpa [#allocation9], 1
    %1210 = vsyncpa [#allocation4], 1
    %1211 = vsyncpa [#allocation13], 1

</llo_original>
